<compile_context>
chip_gen: v7x
topology: tpu7x:2x2x1
jax: 0.10.0
libtpu: 0.0.40
codegen_flags: <defaults>
</compile_context>

<pallas_src>
import math

import jax
import jax.numpy as jnp
import numpy as np
from jax.experimental import pallas as pl
from jax.experimental.pallas import tpu as pltpu

# ----- model hyperparameters (small, consistent with the module) -----
B = 2          # batch
N = 8          # sequence length (tokens)
C = 32         # embedding dim
NUM_HEADS = 4
HEAD_DIM = C // NUM_HEADS
SCALE = HEAD_DIM ** (-0.5)
MLP_RATIO = 4.0
HID = int(C * MLP_RATIO)
PACK = max(C, HID)          # lane width of the packed vector-param slab
LN_EPS = 1e-5
GELU_K = math.sqrt(2.0 / math.pi)


def _layernorm(x, gamma, beta):
    """Single-pass LayerNorm: one read of x, sum and sum-of-squares."""
    inv_c = 1.0 / x.shape[-1]
    mean = jnp.sum(x, axis=-1, keepdims=True) * inv_c
    mean_sq = jnp.sum(x * x, axis=-1, keepdims=True) * inv_c
    var = mean_sq - mean * mean
    return (x - mean) * jax.lax.rsqrt(var + LN_EPS) * gamma + beta


def block_kernel(x_ref, wqkv_ref, wproj_ref, wfc1_ref, wfc2_ref, vecs_ref,
                 o_ref):
    """One grid step handles one batch element: x_ref is (1, N, C)."""
    x = x_ref[0].astype(jnp.float32)                       # (N, C)

    vecs = vecs_ref[...]                                   # (8, PACK)
    g1, b1 = vecs[0, :C], vecs[1, :C]
    g2, b2 = vecs[2, :C], vecs[3, :C]
    b_proj, b_fc2 = vecs[4, :C], vecs[5, :C]
    b_fc1 = vecs[6, :HID]

    # ---------------- attention branch ----------------
    xn = _layernorm(x, g1, b1)                             # (N, C)
    xb = jnp.broadcast_to(xn, (NUM_HEADS, N, C))           # hoisted once

    # Per-head projections via batched matmuls (weights pre-split per head).
    q = jnp.einsum('hnc,hcd->hnd', xb, wqkv_ref[0],
                   preferred_element_type=jnp.float32)     # (H, N, d)
    k = jnp.einsum('hnc,hcd->hnd', xb, wqkv_ref[1],
                   preferred_element_type=jnp.float32)
    v = jnp.einsum('hnc,hcd->hnd', xb, wqkv_ref[2],
                   preferred_element_type=jnp.float32)

    s = jnp.einsum('hqd,hkd->hqk', q, k,
                   preferred_element_type=jnp.float32) * SCALE   # (H, N, N)
    s = s - jnp.max(s, axis=-1, keepdims=True)
    e = jnp.exp(s)
    p = e * pl.reciprocal(jnp.sum(e, axis=-1, keepdims=True), approx=True)

    ctx = jnp.einsum('hqk,hkd->hqd', p, v,
                     preferred_element_type=jnp.float32)         # (H, N, d)
    # Output projection with the head merge folded into the weight layout:
    # proj[h] = ctx[h] @ Wp[h]  then sum over heads (major-axis add, no concat).
    proj = jnp.einsum('hnd,hdc->hnc', ctx, wproj_ref[...],
                      preferred_element_type=jnp.float32)        # (H, N, C)
    attn_out = jnp.sum(proj, axis=0) + b_proj                    # (N, C)

    x = x + attn_out                                       # residual 1

    # ---------------- MLP branch ----------------
    xn2 = _layernorm(x, g2, b2)                            # (N, C)
    h1 = jnp.dot(xn2, wfc1_ref[...],
                 preferred_element_type=jnp.float32) + b_fc1      # (N, HID)
    # tanh-approximate GELU, exactly as in the PyTorch GELU module
    h1 = 0.5 * h1 * (1.0 + jnp.tanh(GELU_K * (h1 + 0.044715 * (h1 * h1 * h1))))
    h2 = jnp.dot(h1, wfc2_ref[...],
                 preferred_element_type=jnp.float32) + b_fc2      # (N, C)

    o_ref[0] = (x + h2).astype(o_ref.dtype)                # residual 2


def _prepare_params(p):
    """Host-side (wrapper) weight re-arrangement — free, removes all in-kernel
    transposes/slices and packs the tiny vector params into one slab."""
    def per_head(w):                       # w: (C_out=C, C_in=C) torch layout
        # -> (H, C_in, d) so  q[h] = xn @ w_h[h]
        return w.reshape(NUM_HEADS, HEAD_DIM, C).transpose(0, 2, 1)

    wq = per_head(p["w_qkv"][:C])
    wk = per_head(p["w_qkv"][C:2 * C])
    wv = per_head(p["w_qkv"][2 * C:])
    wqkv_h = jnp.stack([wq, wk, wv])                       # (3, H, C, d)

    # proj: out[n,c] = sum_{h,d} ctx[h,n,d] * Wp[c, h*d+d]  ->  (H, d, C)
    wproj_h = p["w_proj"].T.reshape(NUM_HEADS, HEAD_DIM, C)

    wfc1_t = p["w_fc1"].T                                  # (C, HID)
    wfc2_t = p["w_fc2"].T                                  # (HID, C)

    vecs = jnp.zeros((8, PACK), jnp.float32)
    vecs = vecs.at[0, :C].set(p["g1"]).at[1, :C].set(p["b1"])
    vecs = vecs.at[2, :C].set(p["g2"]).at[3, :C].set(p["b2"])
    vecs = vecs.at[4, :C].set(p["b_proj"]).at[5, :C].set(p["b_fc2"])
    vecs = vecs.at[6, :HID].set(p["b_fc1"])
    return wqkv_h, wproj_h, wfc1_t, wfc2_t, vecs


def block_forward(x, params):
    """x: (B, N, C) float32. params: dict in PyTorch layout (see init_params)."""
    wqkv_h, wproj_h, wfc1_t, wfc2_t, vecs = _prepare_params(params)

    def full(a):   # resident full-array spec (constant index_map)
        return pl.BlockSpec(a.shape, lambda b: (0,) * a.ndim)

    batch = x.shape[0]
    return pl.pallas_call(
        block_kernel,
        out_shape=jax.ShapeDtypeStruct(x.shape, x.dtype),
        grid=(batch,),
        in_specs=[
            pl.BlockSpec((1, N, C), lambda b: (b, 0, 0)),   # x
            full(wqkv_h), full(wproj_h),                    # attention weights
            full(wfc1_t), full(wfc2_t),                     # MLP weights
            full(vecs),                                     # packed vector params
        ],
        out_specs=pl.BlockSpec((1, N, C), lambda b: (b, 0, 0)),
        compiler_params=pltpu.CompilerParams(
            dimension_semantics=("parallel",)),             # 2 TCs on v7x
    )(x, wqkv_h, wproj_h, wfc1_t, wfc2_t, vecs)


def block_reference(x, p):
    """Pure-JAX reference mirroring the PyTorch Block.forward (eval mode)."""
    def ln(z, g, b):
        m = jnp.mean(z, axis=-1, keepdims=True)
        v = jnp.mean((z - m) ** 2, axis=-1, keepdims=True)
        return (z - m) / jnp.sqrt(v + LN_EPS) * g + b

    Bd, Nd, Cd = x.shape
    xn = ln(x, p["g1"], p["b1"])
    qkv = xn @ p["w_qkv"].T                                        # (B,N,3C)
    qkv = qkv.reshape(Bd, Nd, 3, NUM_HEADS, HEAD_DIM).transpose(2, 0, 3, 1, 4)
    q, k, v = qkv[0], qkv[1], qkv[2]                               # (B,H,N,d)
    attn = (q @ jnp.swapaxes(k, -2, -1)) * SCALE
    attn = jax.nn.softmax(attn, axis=-1)
    a = (attn @ v).transpose(0, 2, 1, 3).reshape(Bd, Nd, Cd)
    a = a @ p["w_proj"].T + p["b_proj"]
    x = x + a

    xn2 = ln(x, p["g2"], p["b2"])
    h1 = xn2 @ p["w_fc1"].T + p["b_fc1"]
    h1 = 0.5 * h1 * (1.0 + jnp.tanh(GELU_K * (h1 + 0.044715 * h1 ** 3)))
    h2 = h1 @ p["w_fc2"].T + p["b_fc2"]
    return x + h2


def init_params(key):
    keys = jax.random.split(key, 8)
    s = 0.02
    return {
        # PyTorch nn.Linear layout: weight is (out_features, in_features)
        "w_qkv":  s * jax.random.normal(keys[0], (3 * C, C), jnp.float32),
        "w_proj": s * jax.random.normal(keys[1], (C, C), jnp.float32),
        "b_proj": s * jax.random.normal(keys[2], (C,), jnp.float32),
        "g1": jnp.ones((C,), jnp.float32),
        "b1": jnp.zeros((C,), jnp.float32),
        "g2": jnp.ones((C,), jnp.float32),
        "b2": jnp.zeros((C,), jnp.float32),
        "w_fc1": s * jax.random.normal(keys[3], (HID, C), jnp.float32),
        "b_fc1": s * jax.random.normal(keys[4], (HID,), jnp.float32),
        "w_fc2": s * jax.random.normal(keys[5], (C, HID), jnp.float32),
        "b_fc2": s * jax.random.normal(keys[6], (C,), jnp.float32),
    }


if __name__ == "__main__":
    key = jax.random.PRNGKey(0)
    kx, kp = jax.random.split(key)
    x = jax.random.normal(kx, (B, N, C), jnp.float32)
    params = init_params(kp)

    out = block_forward(x, params)
    out = jax.block_until_ready(out)

    ref = block_reference(x, params)
    np.testing.assert_allclose(np.asarray(out), np.asarray(ref),
                               rtol=2e-4, atol=2e-4)
    print("KERNEL_OK")
</pallas_src>

<mosaic_0001>
module attributes {stable_mosaic.version = 11 : i64} {
  func.func @block_kernel(%arg0: i32, %arg1: memref<1x8x32xf32, #tpu.memory_space<vmem>>, %arg2: memref<3x4x32x8xf32, #tpu.memory_space<vmem>>, %arg3: memref<4x8x32xf32, #tpu.memory_space<vmem>>, %arg4: memref<32x128xf32, #tpu.memory_space<vmem>>, %arg5: memref<128x32xf32, #tpu.memory_space<vmem>>, %arg6: memref<8x128xf32, #tpu.memory_space<vmem>>, %arg7: memref<1x8x32xf32, #tpu.memory_space<vmem>>) attributes {dimension_semantics = [#tpu.dimension_semantics<parallel>], iteration_bounds = array<i64: 2>, scalar_prefetch = 0 : i64, scratch_operands = 0 : i64, tpu.core_type = #tpu.core_type<tc>, window_params = [{transform_indices = @transform_0, window_bounds = array<i64: 1, 8, 32>}, {pipeline_mode = #tpu.pipeline_mode<synchronous>, transform_indices = @transform_1, window_bounds = array<i64: 3, 4, 32, 8>}, {pipeline_mode = #tpu.pipeline_mode<synchronous>, transform_indices = @transform_2, window_bounds = array<i64: 4, 8, 32>}, {pipeline_mode = #tpu.pipeline_mode<synchronous>, transform_indices = @transform_3, window_bounds = array<i64: 32, 128>}, {pipeline_mode = #tpu.pipeline_mode<synchronous>, transform_indices = @transform_4, window_bounds = array<i64: 128, 32>}, {pipeline_mode = #tpu.pipeline_mode<synchronous>, transform_indices = @transform_5, window_bounds = array<i64: 8, 128>}, {transform_indices = @transform_6, window_bounds = array<i64: 1, 8, 32>}]} {
    %c0 = arith.constant 0 : index
    %c0_0 = arith.constant 0 : index
    %c0_1 = arith.constant 0 : index
    %0 = vector.load %arg1[%c0, %c0_0, %c0_1] : memref<1x8x32xf32, #tpu.memory_space<vmem>>, vector<1x8x32xf32>
    %1 = vector.shape_cast %0 : vector<1x8x32xf32> to vector<8x32xf32>
    %c0_2 = arith.constant 0 : index
    %c0_3 = arith.constant 0 : index
    %2 = vector.load %arg6[%c0_2, %c0_3] : memref<8x128xf32, #tpu.memory_space<vmem>>, vector<8x128xf32>
    %3 = vector.extract_strided_slice %2 {offsets = [0, 0], sizes = [1, 32], strides = [1, 1]} : vector<8x128xf32> to vector<1x32xf32>
    %4 = vector.shape_cast %3 : vector<1x32xf32> to vector<32xf32>
    %5 = vector.extract_strided_slice %2 {offsets = [1, 0], sizes = [1, 32], strides = [1, 1]} : vector<8x128xf32> to vector<1x32xf32>
    %6 = vector.shape_cast %5 : vector<1x32xf32> to vector<32xf32>
    %7 = vector.extract_strided_slice %2 {offsets = [2, 0], sizes = [1, 32], strides = [1, 1]} : vector<8x128xf32> to vector<1x32xf32>
    %8 = vector.shape_cast %7 : vector<1x32xf32> to vector<32xf32>
    %9 = vector.extract_strided_slice %2 {offsets = [3, 0], sizes = [1, 32], strides = [1, 1]} : vector<8x128xf32> to vector<1x32xf32>
    %10 = vector.shape_cast %9 : vector<1x32xf32> to vector<32xf32>
    %11 = vector.extract_strided_slice %2 {offsets = [4, 0], sizes = [1, 32], strides = [1, 1]} : vector<8x128xf32> to vector<1x32xf32>
    %12 = vector.shape_cast %11 : vector<1x32xf32> to vector<32xf32>
    %13 = vector.extract_strided_slice %2 {offsets = [5, 0], sizes = [1, 32], strides = [1, 1]} : vector<8x128xf32> to vector<1x32xf32>
    %14 = vector.shape_cast %13 : vector<1x32xf32> to vector<32xf32>
    %15 = vector.extract_strided_slice %2 {offsets = [6, 0], sizes = [1, 128], strides = [1, 1]} : vector<8x128xf32> to vector<1x128xf32>
    %16 = vector.shape_cast %15 : vector<1x128xf32> to vector<128xf32>
    %cst = arith.constant dense<0.000000e+00> : vector<8xf32>
    %17 = vector.multi_reduction <add>, %1, %cst [1] : vector<8x32xf32> to vector<8xf32>
    %18 = vector.shape_cast %17 : vector<8xf32> to vector<8x1xf32>
    %cst_4 = arith.constant 3.125000e-02 : f32
    %19 = vector.broadcast %cst_4 : f32 to vector<8x1xf32>
    %20 = arith.mulf %18, %19 : vector<8x1xf32>
    %21 = arith.mulf %1, %1 : vector<8x32xf32>
    %cst_5 = arith.constant dense<0.000000e+00> : vector<8xf32>
    %22 = vector.multi_reduction <add>, %21, %cst_5 [1] : vector<8x32xf32> to vector<8xf32>
    %23 = vector.shape_cast %22 : vector<8xf32> to vector<8x1xf32>
    %cst_6 = arith.constant 3.125000e-02 : f32
    %24 = vector.broadcast %cst_6 : f32 to vector<8x1xf32>
    %25 = arith.mulf %23, %24 : vector<8x1xf32>
    %26 = arith.mulf %20, %20 : vector<8x1xf32>
    %27 = arith.subf %25, %26 : vector<8x1xf32>
    %28 = vector.broadcast %20 : vector<8x1xf32> to vector<8x32xf32>
    %29 = arith.subf %1, %28 : vector<8x32xf32>
    %cst_7 = arith.constant 9.99999974E-6 : f32
    %30 = vector.broadcast %cst_7 : f32 to vector<8x1xf32>
    %31 = arith.addf %27, %30 : vector<8x1xf32>
    %32 = math.rsqrt %31 : vector<8x1xf32>
    %33 = vector.broadcast %32 : vector<8x1xf32> to vector<8x32xf32>
    %34 = arith.mulf %29, %33 : vector<8x32xf32>
    %35 = vector.shape_cast %4 : vector<32xf32> to vector<1x32xf32>
    %36 = vector.broadcast %35 : vector<1x32xf32> to vector<8x32xf32>
    %37 = arith.mulf %34, %36 : vector<8x32xf32>
    %38 = vector.shape_cast %6 : vector<32xf32> to vector<1x32xf32>
    %39 = vector.broadcast %38 : vector<1x32xf32> to vector<8x32xf32>
    %40 = arith.addf %37, %39 : vector<8x32xf32>
    %41 = vector.shape_cast %40 : vector<8x32xf32> to vector<1x8x32xf32>
    %42 = vector.broadcast %41 : vector<1x8x32xf32> to vector<4x8x32xf32>
    %c0_8 = arith.constant 0 : index
    %c0_9 = arith.constant 0 : index
    %c0_10 = arith.constant 0 : index
    %c0_11 = arith.constant 0 : index
    %43 = vector.load %arg2[%c0_8, %c0_9, %c0_10, %c0_11] : memref<3x4x32x8xf32, #tpu.memory_space<vmem>>, vector<1x4x32x8xf32>
    %44 = vector.shape_cast %43 : vector<1x4x32x8xf32> to vector<4x32x8xf32>
    "tpu.trace_start"() <{level = 10 : i32, message = "hnc,hcd->hnd"}> : () -> ()
    %cst_12 = arith.constant dense<0.000000e+00> : vector<4x8x8xf32>
    %45 = tpu.matmul %42, %44, %cst_12 {dimension_numbers = #tpu.dot_dimension_numbers<[2], [1], [1], [2], [0, 0, 0, 1, 1, 2], [0], [0]>} : vector<4x8x32xf32>, vector<4x32x8xf32>, vector<4x8x8xf32> -> vector<4x8x8xf32>
    "tpu.trace_stop"() : () -> ()
    %c1 = arith.constant 1 : index
    %c0_13 = arith.constant 0 : index
    %c0_14 = arith.constant 0 : index
    %c0_15 = arith.constant 0 : index
    %46 = vector.load %arg2[%c1, %c0_13, %c0_14, %c0_15] : memref<3x4x32x8xf32, #tpu.memory_space<vmem>>, vector<1x4x32x8xf32>
    %47 = vector.shape_cast %46 : vector<1x4x32x8xf32> to vector<4x32x8xf32>
    "tpu.trace_start"() <{level = 10 : i32, message = "hnc,hcd->hnd"}> : () -> ()
    %cst_16 = arith.constant dense<0.000000e+00> : vector<4x8x8xf32>
    %48 = tpu.matmul %42, %47, %cst_16 {dimension_numbers = #tpu.dot_dimension_numbers<[2], [1], [1], [2], [0, 0, 0, 1, 1, 2], [0], [0]>} : vector<4x8x32xf32>, vector<4x32x8xf32>, vector<4x8x8xf32> -> vector<4x8x8xf32>
    "tpu.trace_stop"() : () -> ()
    %c2 = arith.constant 2 : index
    %c0_17 = arith.constant 0 : index
    %c0_18 = arith.constant 0 : index
    %c0_19 = arith.constant 0 : index
    %49 = vector.load %arg2[%c2, %c0_17, %c0_18, %c0_19] : memref<3x4x32x8xf32, #tpu.memory_space<vmem>>, vector<1x4x32x8xf32>
    %50 = vector.shape_cast %49 : vector<1x4x32x8xf32> to vector<4x32x8xf32>
    "tpu.trace_start"() <{level = 10 : i32, message = "hnc,hcd->hnd"}> : () -> ()
    %cst_20 = arith.constant dense<0.000000e+00> : vector<4x8x8xf32>
    %51 = tpu.matmul %42, %50, %cst_20 {dimension_numbers = #tpu.dot_dimension_numbers<[2], [1], [1], [2], [0, 0, 0, 1, 1, 2], [0], [0]>} : vector<4x8x32xf32>, vector<4x32x8xf32>, vector<4x8x8xf32> -> vector<4x8x8xf32>
    "tpu.trace_stop"() : () -> ()
    "tpu.trace_start"() <{level = 10 : i32, message = "hqd,hkd->hqk"}> : () -> ()
    %cst_21 = arith.constant dense<0.000000e+00> : vector<4x8x8xf32>
    %52 = tpu.matmul %45, %48, %cst_21 {dimension_numbers = #tpu.dot_dimension_numbers<[2], [2], [1], [1], [0, 0, 0, 1, 1, 1], [0], [0]>} : vector<4x8x8xf32>, vector<4x8x8xf32>, vector<4x8x8xf32> -> vector<4x8x8xf32>
    "tpu.trace_stop"() : () -> ()
    %cst_22 = arith.constant 0.353553385 : f32
    %53 = vector.broadcast %cst_22 : f32 to vector<4x8x8xf32>
    %54 = arith.mulf %52, %53 : vector<4x8x8xf32>
    %cst_23 = arith.constant dense<0xFF800000> : vector<4x8xf32>
    %55 = vector.multi_reduction <maximumf>, %54, %cst_23 [2] : vector<4x8x8xf32> to vector<4x8xf32>
    %56 = vector.shape_cast %55 : vector<4x8xf32> to vector<4x8x1xf32>
    %57 = vector.broadcast %56 : vector<4x8x1xf32> to vector<4x8x8xf32>
    %58 = arith.subf %54, %57 : vector<4x8x8xf32>
    %59 = math.exp %58 : vector<4x8x8xf32>
    %cst_24 = arith.constant dense<0.000000e+00> : vector<4x8xf32>
    %60 = vector.multi_reduction <add>, %59, %cst_24 [2] : vector<4x8x8xf32> to vector<4x8xf32>
    %61 = vector.shape_cast %60 : vector<4x8xf32> to vector<4x8x1xf32>
    %62 = tpu.reciprocal %61 {approx = true} : vector<4x8x1xf32> -> vector<4x8x1xf32>
    %63 = vector.broadcast %62 : vector<4x8x1xf32> to vector<4x8x8xf32>
    %64 = arith.mulf %59, %63 : vector<4x8x8xf32>
    "tpu.trace_start"() <{level = 10 : i32, message = "hqk,hkd->hqd"}> : () -> ()
    %cst_25 = arith.constant dense<0.000000e+00> : vector<4x8x8xf32>
    %65 = tpu.matmul %64, %51, %cst_25 {dimension_numbers = #tpu.dot_dimension_numbers<[2], [1], [1], [2], [0, 0, 0, 1, 1, 2], [0], [0]>} : vector<4x8x8xf32>, vector<4x8x8xf32>, vector<4x8x8xf32> -> vector<4x8x8xf32>
    "tpu.trace_stop"() : () -> ()
    %c0_26 = arith.constant 0 : index
    %c0_27 = arith.constant 0 : index
    %c0_28 = arith.constant 0 : index
    %66 = vector.load %arg3[%c0_26, %c0_27, %c0_28] : memref<4x8x32xf32, #tpu.memory_space<vmem>>, vector<4x8x32xf32>
    "tpu.trace_start"() <{level = 10 : i32, message = "hnd,hdc->hnc"}> : () -> ()
    %cst_29 = arith.constant dense<0.000000e+00> : vector<4x8x32xf32>
    %67 = tpu.matmul %65, %66, %cst_29 {dimension_numbers = #tpu.dot_dimension_numbers<[2], [1], [1], [2], [0, 0, 0, 1, 1, 2], [0], [0]>} : vector<4x8x8xf32>, vector<4x8x32xf32>, vector<4x8x32xf32> -> vector<4x8x32xf32>
    "tpu.trace_stop"() : () -> ()
    %cst_30 = arith.constant dense<0.000000e+00> : vector<8x32xf32>
    %68 = vector.multi_reduction <add>, %67, %cst_30 [0] : vector<4x8x32xf32> to vector<8x32xf32>
    %69 = vector.shape_cast %12 : vector<32xf32> to vector<1x32xf32>
    %70 = vector.broadcast %69 : vector<1x32xf32> to vector<8x32xf32>
    %71 = arith.addf %68, %70 : vector<8x32xf32>
    %72 = arith.addf %1, %71 : vector<8x32xf32>
    %cst_31 = arith.constant dense<0.000000e+00> : vector<8xf32>
    %73 = vector.multi_reduction <add>, %72, %cst_31 [1] : vector<8x32xf32> to vector<8xf32>
    %74 = vector.shape_cast %73 : vector<8xf32> to vector<8x1xf32>
    %cst_32 = arith.constant 3.125000e-02 : f32
    %75 = vector.broadcast %cst_32 : f32 to vector<8x1xf32>
    %76 = arith.mulf %74, %75 : vector<8x1xf32>
    %77 = arith.mulf %72, %72 : vector<8x32xf32>
    %cst_33 = arith.constant dense<0.000000e+00> : vector<8xf32>
    %78 = vector.multi_reduction <add>, %77, %cst_33 [1] : vector<8x32xf32> to vector<8xf32>
    %79 = vector.shape_cast %78 : vector<8xf32> to vector<8x1xf32>
    %cst_34 = arith.constant 3.125000e-02 : f32
    %80 = vector.broadcast %cst_34 : f32 to vector<8x1xf32>
    %81 = arith.mulf %79, %80 : vector<8x1xf32>
    %82 = arith.mulf %76, %76 : vector<8x1xf32>
    %83 = arith.subf %81, %82 : vector<8x1xf32>
    %84 = vector.broadcast %76 : vector<8x1xf32> to vector<8x32xf32>
    %85 = arith.subf %72, %84 : vector<8x32xf32>
    %cst_35 = arith.constant 9.99999974E-6 : f32
    %86 = vector.broadcast %cst_35 : f32 to vector<8x1xf32>
    %87 = arith.addf %83, %86 : vector<8x1xf32>
    %88 = math.rsqrt %87 : vector<8x1xf32>
    %89 = vector.broadcast %88 : vector<8x1xf32> to vector<8x32xf32>
    %90 = arith.mulf %85, %89 : vector<8x32xf32>
    %91 = vector.shape_cast %8 : vector<32xf32> to vector<1x32xf32>
    %92 = vector.broadcast %91 : vector<1x32xf32> to vector<8x32xf32>
    %93 = arith.mulf %90, %92 : vector<8x32xf32>
    %94 = vector.shape_cast %10 : vector<32xf32> to vector<1x32xf32>
    %95 = vector.broadcast %94 : vector<1x32xf32> to vector<8x32xf32>
    %96 = arith.addf %93, %95 : vector<8x32xf32>
    %c0_36 = arith.constant 0 : index
    %c0_37 = arith.constant 0 : index
    %97 = vector.load %arg4[%c0_36, %c0_37] : memref<32x128xf32, #tpu.memory_space<vmem>>, vector<32x128xf32>
    %cst_38 = arith.constant dense<0.000000e+00> : vector<8x128xf32>
    %98 = tpu.matmul %96, %97, %cst_38 {dimension_numbers = #tpu.dot_dimension_numbers<[1], [0], [0], [1], [0, 0, 1, 1], [], []>} : vector<8x32xf32>, vector<32x128xf32>, vector<8x128xf32> -> vector<8x128xf32>
    %99 = vector.shape_cast %16 : vector<128xf32> to vector<1x128xf32>
    %100 = vector.broadcast %99 : vector<1x128xf32> to vector<8x128xf32>
    %101 = arith.addf %98, %100 : vector<8x128xf32>
    %cst_39 = arith.constant 5.000000e-01 : f32
    %102 = vector.broadcast %cst_39 : f32 to vector<8x128xf32>
    %103 = arith.mulf %102, %101 : vector<8x128xf32>
    %104 = arith.mulf %101, %101 : vector<8x128xf32>
    %105 = arith.mulf %104, %101 : vector<8x128xf32>
    %cst_40 = arith.constant 4.471500e-02 : f32
    %106 = vector.broadcast %cst_40 : f32 to vector<8x128xf32>
    %107 = arith.mulf %106, %105 : vector<8x128xf32>
    %108 = arith.addf %101, %107 : vector<8x128xf32>
    %cst_41 = arith.constant 0.797884583 : f32
    %109 = vector.broadcast %cst_41 : f32 to vector<8x128xf32>
    %110 = arith.mulf %109, %108 : vector<8x128xf32>
    %111 = math.tanh %110 : vector<8x128xf32>
    %cst_42 = arith.constant 1.000000e+00 : f32
    %112 = vector.broadcast %cst_42 : f32 to vector<8x128xf32>
    %113 = arith.addf %112, %111 : vector<8x128xf32>
    %114 = arith.mulf %103, %113 : vector<8x128xf32>
    %c0_43 = arith.constant 0 : index
    %c0_44 = arith.constant 0 : index
    %115 = vector.load %arg5[%c0_43, %c0_44] : memref<128x32xf32, #tpu.memory_space<vmem>>, vector<128x32xf32>
    %cst_45 = arith.constant dense<0.000000e+00> : vector<8x32xf32>
    %116 = tpu.matmul %114, %115, %cst_45 {dimension_numbers = #tpu.dot_dimension_numbers<[1], [0], [0], [1], [0, 0, 1, 1], [], []>} : vector<8x128xf32>, vector<128x32xf32>, vector<8x32xf32> -> vector<8x32xf32>
    %117 = vector.shape_cast %14 : vector<32xf32> to vector<1x32xf32>
    %118 = vector.broadcast %117 : vector<1x32xf32> to vector<8x32xf32>
    %119 = arith.addf %116, %118 : vector<8x32xf32>
    %120 = arith.addf %72, %119 : vector<8x32xf32>
    %c0_46 = arith.constant 0 : index
    %c0_47 = arith.constant 0 : index
    %c0_48 = arith.constant 0 : index
    %121 = vector.load %arg7[%c0_46, %c0_47, %c0_48] : memref<1x8x32xf32, #tpu.memory_space<vmem>>, vector<1x8x32xf32>
    %122 = vector.shape_cast %121 : vector<1x8x32xf32> to vector<8x32xf32>
    %123 = vector.shape_cast %120 : vector<8x32xf32> to vector<1x8x32xf32>
    tpu.vector_store %arg7[%c0_46, %c0_47, %c0_48], %123 {strides = array<i32>} : memref<1x8x32xf32, #tpu.memory_space<vmem>>, vector<1x8x32xf32>,
    return
  }
  func.func @transform_0(%arg0: i32) -> (i32, i32, i32) {
    %c0_i32 = arith.constant 0 : i32
    %c0_i32_0 = arith.constant 0 : i32
    %c0_i32_1 = arith.constant 0 : i32
    return %arg0, %c0_i32, %c0_i32_0 : i32, i32, i32
  }
  func.func @transform_1(%arg0: i32) -> (i32, i32, i32, i32) {
    %c0_i32 = arith.constant 0 : i32
    %c0_i32_0 = arith.constant 0 : i32
    %c0_i32_1 = arith.constant 0 : i32
    %c0_i32_2 = arith.constant 0 : i32
    %c0_i32_3 = arith.constant 0 : i32
    return %c0_i32, %c0_i32_0, %c0_i32_1, %c0_i32_2 : i32, i32, i32, i32
  }
  func.func @transform_2(%arg0: i32) -> (i32, i32, i32) {
    %c0_i32 = arith.constant 0 : i32
    %c0_i32_0 = arith.constant 0 : i32
    %c0_i32_1 = arith.constant 0 : i32
    %c0_i32_2 = arith.constant 0 : i32
    return %c0_i32, %c0_i32_0, %c0_i32_1 : i32, i32, i32
  }
  func.func @transform_3(%arg0: i32) -> (i32, i32) {
    %c0_i32 = arith.constant 0 : i32
    %c0_i32_0 = arith.constant 0 : i32
    %c0_i32_1 = arith.constant 0 : i32
    return %c0_i32, %c0_i32_0 : i32, i32
  }
  func.func @transform_4(%arg0: i32) -> (i32, i32) {
    %c0_i32 = arith.constant 0 : i32
    %c0_i32_0 = arith.constant 0 : i32
    %c0_i32_1 = arith.constant 0 : i32
    return %c0_i32, %c0_i32_0 : i32, i32
  }
  func.func @transform_5(%arg0: i32) -> (i32, i32) {
    %c0_i32 = arith.constant 0 : i32
    %c0_i32_0 = arith.constant 0 : i32
    %c0_i32_1 = arith.constant 0 : i32
    return %c0_i32, %c0_i32_0 : i32, i32
  }
  func.func @transform_6(%arg0: i32) -> (i32, i32, i32) {
    %c0_i32 = arith.constant 0 : i32
    %c0_i32_0 = arith.constant 0 : i32
    %c0_i32_1 = arith.constant 0 : i32
    return %arg0, %c0_i32, %c0_i32_0 : i32, i32, i32
  }
}

</mosaic_0001>

<llo_original>
// kernel: tpu_custom_call.1
$region0: #{tpu_custom_call.1}
  #allocation0 [shape = 'u32[]', space=smem, size = 0x4, offset = 0x4, fixed_abs, tag = 'smem constant byte address 0x4 - core index']
  #allocation1 [shape = 'u32[144,128]{1,0:T(1,128)}', space=vmem, size = 0x12000, scoped, tag = 'internal scratch']
  %s0 = inlined_call_operand.vmem [shape: f32[2,8,32], index: 0, kind: input, shape index: {}]
  %s1 = inlined_call_operand.vmem [shape: f32[3,4,32,8], index: 1, kind: input, shape index: {}]
  %s2 = inlined_call_operand.vmem [shape: f32[4,8,32], index: 2, kind: input, shape index: {}]
  %s3 = inlined_call_operand.vmem [shape: f32[32,128], index: 3, kind: input, shape index: {}]
  %s4 = inlined_call_operand.vmem [shape: f32[128,32], index: 4, kind: input, shape index: {}]
  %s5 = inlined_call_operand.vmem [shape: f32[8,128], index: 5, kind: input, shape index: {}]
  %s6 = inlined_call_operand.hbm [shape: f32[2,8,32], index: 6, kind: output, shape index: {}]
  %s7 = sld [smem:[#allocation0]]
  $region57: #{tpu_custom_call.1} parent=0
    _
  %s9 = ssub.s32 1, %s7
  %s10 = scalar_select 0, %s9, %s7
  $region1: #{tpu_custom_call.1} parent=0
    #allocation2 [shape = 'u8[8192]{0}', space=vmem, size = 0x2000, scoped, tag = 'output window, operand 0']
    #allocation3 [shape = 's32[2]{0}', space=sflag, size = 0x8, scoped, tag = 'scoped memory for tpu_custom_call.1']
    %11 = vsyncpa [#allocation3], 0
    %s12 = scalar_lea.sflag [#allocation3], 1
    %13 = vsyncpa %s12, 0
    loop: start=0, step=1, limit=4
    $region2: #{tpu_custom_call.1} parent=1 // loop_pre_header
      _
    $region3: #{tpu_custom_call.1} parent=1 // loop_header
      %s15 = sphi 0, %s19
      %p16 = scmp.ge.s32.totalorder %s15, 4
      %s25 = sphi 0, %s27
      %s28 = sphi 0, %s25
      %s29 = sphi 0, %s28
      %s45 = sphi 0, %s29
      %s49 = sphi 0, %s49
      %s51 = sphi 0, %s49
      %s52 = sphi 0, %s51
      %s66 = sphi 0, %s52
      %s70 = sphi 0, %s70
      %s72 = sphi 0, %s70
      %s73 = sphi 0, %s72
      %s87 = sphi 0, %s73
      %s91 = sphi 0, %s91
      %s93 = sphi 0, %s91
      %s94 = sphi 0, %s93
      %s108 = sphi 0, %s94
      %s112 = sphi 0, %s112
      %s114 = sphi 0, %s112
      %s115 = sphi 0, %s114
      %s129 = sphi 0, %s115
      %s133 = sphi 0, %s133
      %s135 = sphi 0, %s133
      %s136 = sphi 0, %s135
      %s150 = sphi 0, %s136
      %s156 = sphi 0, %s158
      %s159 = sphi 0, %s156
      %s160 = sphi 0, %s159
      %s176 = sphi 0, %s160
    $region4: #{tpu_custom_call.1} parent=1 // loop_header_branch
      %18 = sbr.rel (%p16) target = $region8
    $region5: #{tpu_custom_call.1} parent=1 // loop_body
      %s20 = ssub.s32 %s15, 1
      %s21 = ssub.s32 %s15, 2
      %s22 = sadd.s32 %s15, 1
      %s23 = ssub.s32 %s15, %s22
      %p24 = scmp.eq.s32.totalorder %s23, 0
      %s26 = sadd.s32 %s25, 1
      %s27 = scalar_select %p24, %s25, %s26
      %p30 = pneg %p24
      %p31 = scmp.eq.s32.totalorder %s15, 1
      %p32 = por %p30, %p31
      %p33 = scmp.ne.s32.totalorder %s25, %s28
      %p34 = scmp.eq.s32.totalorder %s15, 0
      %p35 = por %p33, %p34
      %p36 = scmp.ne.s32.totalorder %s25, %s28
      %p37 = scmp.eq.s32.totalorder %s20, 1
      %p38 = por %p36, %p37
      %p39 = scmp.ne.s32.totalorder %s28, %s29
      %p40 = scmp.eq.s32.totalorder %s20, 0
      %p41 = por %p39, %p40
      %p42 = scmp.ne.s32.totalorder %s28, %s29
      %p43 = scmp.eq.s32.totalorder %s21, 1
      %p44 = por %p42, %p43
      %p46 = scmp.ne.s32.totalorder %s29, %s45
      %p47 = scmp.eq.s32.totalorder %s21, 0
      %p48 = por %p46, %p47
      %s50 = sadd.s32 %s49, 1
      %p53 = scmp.eq.s32.totalorder %s15, 1
      %p54 = scmp.ne.s32.totalorder %s49, %s51
      %p55 = scmp.eq.s32.totalorder %s15, 0
      %p56 = por %p54, %p55
      %p57 = scmp.ne.s32.totalorder %s49, %s51
      %p58 = scmp.eq.s32.totalorder %s20, 1
      %p59 = por %p57, %p58
      %p60 = scmp.ne.s32.totalorder %s51, %s52
      %p61 = scmp.eq.s32.totalorder %s20, 0
      %p62 = por %p60, %p61
      %p63 = scmp.ne.s32.totalorder %s51, %s52
      %p64 = scmp.eq.s32.totalorder %s21, 1
      %p65 = por %p63, %p64
      %p67 = scmp.ne.s32.totalorder %s52, %s66
      %p68 = scmp.eq.s32.totalorder %s21, 0
      %p69 = por %p67, %p68
      %s71 = sadd.s32 %s70, 1
      %p74 = scmp.eq.s32.totalorder %s15, 1
      %p75 = scmp.ne.s32.totalorder %s70, %s72
      %p76 = scmp.eq.s32.totalorder %s15, 0
      %p77 = por %p75, %p76
      %p78 = scmp.ne.s32.totalorder %s70, %s72
      %p79 = scmp.eq.s32.totalorder %s20, 1
      %p80 = por %p78, %p79
      %p81 = scmp.ne.s32.totalorder %s72, %s73
      %p82 = scmp.eq.s32.totalorder %s20, 0
      %p83 = por %p81, %p82
      %p84 = scmp.ne.s32.totalorder %s72, %s73
      %p85 = scmp.eq.s32.totalorder %s21, 1
      %p86 = por %p84, %p85
      %p88 = scmp.ne.s32.totalorder %s73, %s87
      %p89 = scmp.eq.s32.totalorder %s21, 0
      %p90 = por %p88, %p89
      %s92 = sadd.s32 %s91, 1
      %p95 = scmp.eq.s32.totalorder %s15, 1
      %p96 = scmp.ne.s32.totalorder %s91, %s93
      %p97 = scmp.eq.s32.totalorder %s15, 0
      %p98 = por %p96, %p97
      %p99 = scmp.ne.s32.totalorder %s91, %s93
      %p100 = scmp.eq.s32.totalorder %s20, 1
      %p101 = por %p99, %p100
      %p102 = scmp.ne.s32.totalorder %s93, %s94
      %p103 = scmp.eq.s32.totalorder %s20, 0
      %p104 = por %p102, %p103
      %p105 = scmp.ne.s32.totalorder %s93, %s94
      %p106 = scmp.eq.s32.totalorder %s21, 1
      %p107 = por %p105, %p106
      %p109 = scmp.ne.s32.totalorder %s94, %s108
      %p110 = scmp.eq.s32.totalorder %s21, 0
      %p111 = por %p109, %p110
      %s113 = sadd.s32 %s112, 1
      %p116 = scmp.eq.s32.totalorder %s15, 1
      %p117 = scmp.ne.s32.totalorder %s112, %s114
      %p118 = scmp.eq.s32.totalorder %s15, 0
      %p119 = por %p117, %p118
      %p120 = scmp.ne.s32.totalorder %s112, %s114
      %p121 = scmp.eq.s32.totalorder %s20, 1
      %p122 = por %p120, %p121
      %p123 = scmp.ne.s32.totalorder %s114, %s115
      %p124 = scmp.eq.s32.totalorder %s20, 0
      %p125 = por %p123, %p124
      %p126 = scmp.ne.s32.totalorder %s114, %s115
      %p127 = scmp.eq.s32.totalorder %s21, 1
      %p128 = por %p126, %p127
      %p130 = scmp.ne.s32.totalorder %s115, %s129
      %p131 = scmp.eq.s32.totalorder %s21, 0
      %p132 = por %p130, %p131
      %s134 = sadd.s32 %s133, 1
      %p137 = scmp.eq.s32.totalorder %s15, 1
      %p138 = scmp.ne.s32.totalorder %s133, %s135
      %p139 = scmp.eq.s32.totalorder %s15, 0
      %p140 = por %p138, %p139
      %p141 = scmp.ne.s32.totalorder %s133, %s135
      %p142 = scmp.eq.s32.totalorder %s20, 1
      %p143 = por %p141, %p142
      %p144 = scmp.ne.s32.totalorder %s135, %s136
      %p145 = scmp.eq.s32.totalorder %s20, 0
      %p146 = por %p144, %p145
      %p147 = scmp.ne.s32.totalorder %s135, %s136
      %p148 = scmp.eq.s32.totalorder %s21, 1
      %p149 = por %p147, %p148
      %p151 = scmp.ne.s32.totalorder %s136, %s150
      %p152 = scmp.eq.s32.totalorder %s21, 0
      %p153 = por %p151, %p152
      %s154 = ssub.s32 %s15, %s22
      %p155 = scmp.eq.s32.totalorder %s154, 0
      %s157 = sadd.s32 %s156, 1
      %s158 = scalar_select %p155, %s156, %s157
      %p161 = pneg %p155
      %p162 = scmp.eq.s32.totalorder %s15, 1
      %p163 = por %p161, %p162
      %p164 = scmp.ne.s32.totalorder %s156, %s159
      %p165 = scmp.eq.s32.totalorder %s15, 0
      %p166 = por %p164, %p165
      %p167 = scmp.ne.s32.totalorder %s156, %s159
      %p168 = scmp.eq.s32.totalorder %s20, 1
      %p169 = por %p167, %p168
      %p170 = scmp.ne.s32.totalorder %s159, %s160
      %p171 = scmp.eq.s32.totalorder %s20, 0
      %p172 = por %p170, %p171
      %p173 = scmp.ne.s32.totalorder %s159, %s160
      %p174 = scmp.eq.s32.totalorder %s21, 1
      %p175 = por %p173, %p174
      %p177 = scmp.ne.s32.totalorder %s160, %s176
      %p178 = scmp.eq.s32.totalorder %s21, 0
      %p179 = por %p177, %p178
      %p180 = scmp.le.s32.totalorder 1, %s15
      %p181 = scmp.lt.s32.totalorder %s15, 3
      %p182 = pnand %p180, %p181
      %p183 = pneg %p182
      // Predicated region
      $region9: #{tpu_custom_call.1} parent=5 // pred_check
        _
      $region10: #{tpu_custom_call.1} parent=5 // pred_check_branch
        %185 = sbr.rel (%p182) target = $region12
      $region11: #{tpu_custom_call.1} parent=5 // pred_region
        %s186 = ssub.s32 %s15, 1
        // Predicated region
        $region13: #{tpu_custom_call.1} parent=11 // pred_check
          %p187 = pneg %p62
        $region14: #{tpu_custom_call.1} parent=11 // pred_check_branch
          %189 = sbr.rel (%p187) target = $region16
        $region15: #{tpu_custom_call.1} parent=11 // pred_region
          _
        $region16: #{tpu_custom_call.1} parent=11 // pred_fallthru
          _
        // Predicated region
        $region17: #{tpu_custom_call.1} parent=11 // pred_check
          %p190 = pneg %p83
        $region18: #{tpu_custom_call.1} parent=11 // pred_check_branch
          %192 = sbr.rel (%p190) target = $region20
        $region19: #{tpu_custom_call.1} parent=11 // pred_region
          _
        $region20: #{tpu_custom_call.1} parent=11 // pred_fallthru
          _
        // Predicated region
        $region21: #{tpu_custom_call.1} parent=11 // pred_check
          %p193 = pneg %p104
        $region22: #{tpu_custom_call.1} parent=11 // pred_check_branch
          %195 = sbr.rel (%p193) target = $region24
        $region23: #{tpu_custom_call.1} parent=11 // pred_region
          _
        $region24: #{tpu_custom_call.1} parent=11 // pred_fallthru
          _
        // Predicated region
        $region25: #{tpu_custom_call.1} parent=11 // pred_check
          %p196 = pneg %p125
        $region26: #{tpu_custom_call.1} parent=11 // pred_check_branch
          %198 = sbr.rel (%p196) target = $region28
        $region27: #{tpu_custom_call.1} parent=11 // pred_region
          _
        $region28: #{tpu_custom_call.1} parent=11 // pred_fallthru
          _
        // Predicated region
        $region29: #{tpu_custom_call.1} parent=11 // pred_check
          %p199 = pneg %p146
        $region30: #{tpu_custom_call.1} parent=11 // pred_check_branch
          %201 = sbr.rel (%p199) target = $region32
        $region31: #{tpu_custom_call.1} parent=11 // pred_region
          _
        $region32: #{tpu_custom_call.1} parent=11 // pred_fallthru
          _
      $region12: #{tpu_custom_call.1} parent=5 // pred_fallthru
        _
      %p202 = scmp.lt.s32.totalorder %s15, 2
      // Predicated region
      $region33: #{tpu_custom_call.1} parent=5 // pred_check
        %p203 = pneg %p202
      $region34: #{tpu_custom_call.1} parent=5 // pred_check_branch
        %205 = sbr.rel (%p203) target = $region36
      $region35: #{tpu_custom_call.1} parent=5 // pred_region
        // Predicated region
        $region37: #{tpu_custom_call.1} parent=35 // pred_check
          %p206 = pneg %p35
        $region38: #{tpu_custom_call.1} parent=35 // pred_check_branch
          %208 = sbr.rel (%p206) target = $region40
        $region39: #{tpu_custom_call.1} parent=35 // pred_region
          %p209 = scmp.lt.s32.totalorder %s15, 1
          %s210 = scalar_select %p209, %s15, 1
          %s211 = smul.addr %s210, 8
          %s212 = scalar_lea.vmem %s0, %s211
        $region40: #{tpu_custom_call.1} parent=35 // pred_fallthru
          _
      $region36: #{tpu_custom_call.1} parent=5 // pred_fallthru
        _
      %p213 = scmp.le.s32.totalorder 1, %s15
      %p214 = scmp.lt.s32.totalorder %s15, 3
      %p215 = pnand %p213, %p214
      %p216 = pneg %p215
      // Predicated region
      $region41: #{tpu_custom_call.1} parent=5 // pred_check
        _
      $region42: #{tpu_custom_call.1} parent=5 // pred_check_branch
        %218 = sbr.rel (%p215) target = $region44
      $region43: #{tpu_custom_call.1} parent=5 // pred_region
        %s219 = ssub.s32 %s15, 1
        %p220 = scmp.lt.s32.totalorder %s20, 1
        %s221 = scalar_select %p220, %s20, 1
        %s222 = smul.addr %s221, 8
        %s223 = scalar_lea.vmem %s0, %s222
        %p224 = pneg %p41
        %p225 = pneg %p38
        %p226 = pneg %p62
        %p227 = pneg %p59
        %p228 = pneg %p83
        %p229 = pneg %p80
        %p230 = pneg %p104
        %p231 = pneg %p101
        %p232 = pneg %p125
        %p233 = pneg %p122
        %p234 = pneg %p146
        %p235 = pneg %p143
        %p236 = pneg %p172
        %p237 = pneg %p169
        %s238 = sand.u32 %s159, 1
        %s239 = scalar_lea.sflag [#allocation3], %s238
        %s240 = sand.u32 %s159, 1
        %s241 = smul.addr %s240, 8
        %s242 = scalar_lea.vmem [#allocation2], %s241
        %p243 = scmp.lt.s32.totalorder %s20, 1
        %s244 = scalar_select %p243, %s20, 1
        %s245 = smul.addr %s244, 8
        %s246 = scalar_lea.vmem %s0, %s245
        %v247 = vld [vmem:[%s246] sm:$0xff]
        %v248 = vld [vmem:[%s5] sm:$0xff]
        %vm249 = vcmask 261120
        %v250 = vsel %vm249, %v247, 0.0
        %251 = vadd.xlane.f32.xlu0 %v250
        %v252 = vpop.xlane.xlu0 %251
        %v253 = vmul.f32 %v252, 0.03125
        %v254 = vmul.f32 %v247, %v247
        %v255 = vsel %vm249, %v254, 0.0
        %256 = vadd.xlane.f32.xlu0 %v255
        %v257 = vpop.xlane.xlu0 %256
        %v258 = vmul.f32 %v257, 0.03125
        %v259 = vmul.f32 %v253, %v253
        %v260 = vsub.f32 %v258, %v259
        %v261 = vsub.f32 %v247, %v253
        %v262 = vadd.f32 %v260, 1e-05
        %v263 = vrsqrt.pop %v262
        %v264 = vmul.f32 %v261, %v263
        %v265 = vlaneseq
        %v266 = vshrl.u32 %v265, 7
        %v267 = vsub.s32 0, %v266
        %v268 = vrot.slane %v248, %v267
        %v269 = vmul.f32 %v264, %v268
        %v270 = vlaneseq
        %v271 = vshrl.u32 %v270, 7
        %v272 = vsub.s32 1, %v271
        %v273 = vrot.slane %v248, %v272
        %v274 = vadd.f32 %v269, %v273
        %v275 = vld [vmem:[%s1] sm:$0xff]
        %v276 = vld [vmem:[%s1 + $0x8] sm:$0xff]
        %v277 = vld [vmem:[%s1 + $0x10] sm:$0xff]
        %v278 = vld [vmem:[%s1 + $0x18] sm:$0xff]
        %v279 = vld [vmem:[%s1 + $0x20] sm:$0xff]
        %v280 = vld [vmem:[%s1 + $0x28] sm:$0xff]
        %v281 = vld [vmem:[%s1 + $0x30] sm:$0xff]
        %v282 = vld [vmem:[%s1 + $0x38] sm:$0xff]
        %v283 = vld [vmem:[%s1 + $0x40] sm:$0xff]
        %v284 = vld [vmem:[%s1 + $0x48] sm:$0xff]
        %v285 = vld [vmem:[%s1 + $0x50] sm:$0xff]
        %v286 = vld [vmem:[%s1 + $0x58] sm:$0xff]
        %v287 = vld [vmem:[%s1 + $0x60] sm:$0xff]
        %v288 = vld [vmem:[%s1 + $0x68] sm:$0xff]
        %v289 = vld [vmem:[%s1 + $0x70] sm:$0xff]
        %v290 = vld [vmem:[%s1 + $0x78] sm:$0xff]
        %v292 = vsel %vm249, %v274, 0
        %294 = vmatprep.subr.mxu0 0.0
        %295 = vmatpush1.msra.mxu0 %v275
        %296 = vmatprep.subr.mxu0 0.0
        %297 = vmatpush1.msra.mxu0 %v276
        %298 = vmatprep.subr.mxu0 0.0
        %299 = vmatpush1.msra.mxu0 %v277
        %300 = vmatprep.subr.mxu0 0.0
        %301 = vmatpush1.msra.mxu0 %v278
        %302 = vmatprep.subr.mxu0 0.0
        %303 = vmatpush1.msra.mxu0 0.0
        %304 = vmatprep.subr.mxu0 0.0
        %305 = vmatpush1.msra.mxu0 0.0
        %306 = vmatprep.subr.mxu0 0.0
        %307 = vmatpush1.msra.mxu0 0.0
        %308 = vmatprep.subr.mxu0 0.0
        %309 = vmatpush1.msra.mxu0 0.0
        %310 = vmatprep.subr.mxu0 0.0
        %311 = vmatpush1.msra.mxu0 0.0
        %312 = vmatprep.subr.mxu0 0.0
        %313 = vmatpush1.msra.mxu0 0.0
        %314 = vmatprep.subr.mxu0 0.0
        %315 = vmatpush1.msra.mxu0 0.0
        %316 = vmatprep.subr.mxu0 0.0
        %317 = vmatpush1.msra.mxu0 0.0
        %318 = vmatprep.subr.mxu0 0.0
        %319 = vmatpush1.msra.mxu0 0.0
        %320 = vmatprep.subr.mxu0 0.0
        %321 = vmatpush1.msra.mxu0 0.0
        %322 = vmatprep.subr.mxu0 0.0
        %323 = vmatpush1.msra.mxu0 0.0
        %324 = vmatprep.subr.mxu0 0.0
        %325 = vmatpush1.msra.mxu0 0.0
        %326 = vmatprep.subr.mxu0 0.0
        %327 = vmatpush1.msra.mxu0 0.0
        %328 = vmatprep.subr.mxu0 0.0
        %329 = vmatpush1.msra.mxu0 0.0
        %330 = vmatprep.subr.mxu0 0.0
        %331 = vmatpush1.msra.mxu0 0.0
        %332 = vmatprep.subr.mxu0 0.0
        %333 = vmatpush1.msra.mxu0 0.0
        %334 = vmatprep.subr.mxu0 0.0
        %335 = vmatpush1.msra.mxu0 0.0
        %336 = vmatprep.subr.mxu0 0.0
        %337 = vmatpush1.msra.mxu0 0.0
        %338 = vmatprep.subr.mxu0 0.0
        %339 = vmatpush1.msra.mxu0 0.0
        %340 = vmatprep.subr.mxu0 0.0
        %341 = vmatpush1.msra.mxu0 0.0
        %342 = vmatprep.subr.mxu0 0.0
        %343 = vmatpush1.msra.mxu0 0.0
        %344 = vmatprep.subr.mxu0 0.0
        %345 = vmatpush1.msra.mxu0 0.0
        %346 = vmatprep.subr.mxu0 0.0
        %347 = vmatpush1.msra.mxu0 0.0
        %348 = vmatprep.subr.mxu0 0.0
        %349 = vmatpush1.msra.mxu0 0.0
        %350 = vmatprep.subr.mxu0 0.0
        %351 = vmatpush1.msra.mxu0 0.0
        %352 = vmatprep.subr.mxu0 0.0
        %353 = vmatpush1.msra.mxu0 0.0
        %354 = vmatprep.subr.mxu0 0.0
        %355 = vmatpush1.msra.mxu0 0.0
        %356 = vmatprep.subr.mxu0 0.0
        %357 = vmatpush1.msra.mxu0 0.0
        %358 = vmatprep.mubr.f32.mxu0 0.0
        %359 = vmatmul.mubr.f32.gmra.mrb[0].mxu0 %v292
        %v360 = vpop.f32.mrb[0].mxu0
        %v361 = vadd.f32 0.0, %v360
        %v362 = vpop.f32.mrb[0].mxu0
        %363 = vdwg.mxu0
        %364 = vmatprep.subr.mxu0 0.0
        %365 = vmatpush1.msra.mxu0 %v279
        %366 = vmatprep.subr.mxu0 0.0
        %367 = vmatpush1.msra.mxu0 %v280
        %368 = vmatprep.subr.mxu0 0.0
        %369 = vmatpush1.msra.mxu0 %v281
        %370 = vmatprep.subr.mxu0 0.0
        %371 = vmatpush1.msra.mxu0 %v282
        %372 = vmatprep.subr.mxu0 0.0
        %373 = vmatpush1.msra.mxu0 0.0
        %374 = vmatprep.subr.mxu0 0.0
        %375 = vmatpush1.msra.mxu0 0.0
        %376 = vmatprep.subr.mxu0 0.0
        %377 = vmatpush1.msra.mxu0 0.0
        %378 = vmatprep.subr.mxu0 0.0
        %379 = vmatpush1.msra.mxu0 0.0
        %380 = vmatprep.subr.mxu0 0.0
        %381 = vmatpush1.msra.mxu0 0.0
        %382 = vmatprep.subr.mxu0 0.0
        %383 = vmatpush1.msra.mxu0 0.0
        %384 = vmatprep.subr.mxu0 0.0
        %385 = vmatpush1.msra.mxu0 0.0
        %386 = vmatprep.subr.mxu0 0.0
        %387 = vmatpush1.msra.mxu0 0.0
        %388 = vmatprep.subr.mxu0 0.0
        %389 = vmatpush1.msra.mxu0 0.0
        %390 = vmatprep.subr.mxu0 0.0
        %391 = vmatpush1.msra.mxu0 0.0
        %392 = vmatprep.subr.mxu0 0.0
        %393 = vmatpush1.msra.mxu0 0.0
        %394 = vmatprep.subr.mxu0 0.0
        %395 = vmatpush1.msra.mxu0 0.0
        %396 = vmatprep.subr.mxu0 0.0
        %397 = vmatpush1.msra.mxu0 0.0
        %398 = vmatprep.subr.mxu0 0.0
        %399 = vmatpush1.msra.mxu0 0.0
        %400 = vmatprep.subr.mxu0 0.0
        %401 = vmatpush1.msra.mxu0 0.0
        %402 = vmatprep.subr.mxu0 0.0
        %403 = vmatpush1.msra.mxu0 0.0
        %404 = vmatprep.subr.mxu0 0.0
        %405 = vmatpush1.msra.mxu0 0.0
        %406 = vmatprep.subr.mxu0 0.0
        %407 = vmatpush1.msra.mxu0 0.0
        %408 = vmatprep.subr.mxu0 0.0
        %409 = vmatpush1.msra.mxu0 0.0
        %410 = vmatprep.subr.mxu0 0.0
        %411 = vmatpush1.msra.mxu0 0.0
        %412 = vmatprep.subr.mxu0 0.0
        %413 = vmatpush1.msra.mxu0 0.0
        %414 = vmatprep.subr.mxu0 0.0
        %415 = vmatpush1.msra.mxu0 0.0
        %416 = vmatprep.subr.mxu0 0.0
        %417 = vmatpush1.msra.mxu0 0.0
        %418 = vmatprep.subr.mxu0 0.0
        %419 = vmatpush1.msra.mxu0 0.0
        %420 = vmatprep.subr.mxu0 0.0
        %421 = vmatpush1.msra.mxu0 0.0
        %422 = vmatprep.subr.mxu0 0.0
        %423 = vmatpush1.msra.mxu0 0.0
        %424 = vmatprep.subr.mxu0 0.0
        %425 = vmatpush1.msra.mxu0 0.0
        %426 = vmatprep.subr.mxu0 0.0
        %427 = vmatpush1.msra.mxu0 0.0
        %428 = vmatprep.mubr.f32.mxu0 0.0
        %429 = vmatmul.mubr.f32.gmra.mrb[0].mxu0 %v292
        %v430 = vpop.f32.mrb[0].mxu0
        %v431 = vadd.f32 0.0, %v430
        %v432 = vpop.f32.mrb[0].mxu0
        %433 = vdwg.mxu0
        %434 = vmatprep.subr.mxu0 0.0
        %435 = vmatpush1.msra.mxu0 %v283
        %436 = vmatprep.subr.mxu0 0.0
        %437 = vmatpush1.msra.mxu0 %v284
        %438 = vmatprep.subr.mxu0 0.0
        %439 = vmatpush1.msra.mxu0 %v285
        %440 = vmatprep.subr.mxu0 0.0
        %441 = vmatpush1.msra.mxu0 %v286
        %442 = vmatprep.subr.mxu0 0.0
        %443 = vmatpush1.msra.mxu0 0.0
        %444 = vmatprep.subr.mxu0 0.0
        %445 = vmatpush1.msra.mxu0 0.0
        %446 = vmatprep.subr.mxu0 0.0
        %447 = vmatpush1.msra.mxu0 0.0
        %448 = vmatprep.subr.mxu0 0.0
        %449 = vmatpush1.msra.mxu0 0.0
        %450 = vmatprep.subr.mxu0 0.0
        %451 = vmatpush1.msra.mxu0 0.0
        %452 = vmatprep.subr.mxu0 0.0
        %453 = vmatpush1.msra.mxu0 0.0
        %454 = vmatprep.subr.mxu0 0.0
        %455 = vmatpush1.msra.mxu0 0.0
        %456 = vmatprep.subr.mxu0 0.0
        %457 = vmatpush1.msra.mxu0 0.0
        %458 = vmatprep.subr.mxu0 0.0
        %459 = vmatpush1.msra.mxu0 0.0
        %460 = vmatprep.subr.mxu0 0.0
        %461 = vmatpush1.msra.mxu0 0.0
        %462 = vmatprep.subr.mxu0 0.0
        %463 = vmatpush1.msra.mxu0 0.0
        %464 = vmatprep.subr.mxu0 0.0
        %465 = vmatpush1.msra.mxu0 0.0
        %466 = vmatprep.subr.mxu0 0.0
        %467 = vmatpush1.msra.mxu0 0.0
        %468 = vmatprep.subr.mxu0 0.0
        %469 = vmatpush1.msra.mxu0 0.0
        %470 = vmatprep.subr.mxu0 0.0
        %471 = vmatpush1.msra.mxu0 0.0
        %472 = vmatprep.subr.mxu0 0.0
        %473 = vmatpush1.msra.mxu0 0.0
        %474 = vmatprep.subr.mxu0 0.0
        %475 = vmatpush1.msra.mxu0 0.0
        %476 = vmatprep.subr.mxu0 0.0
        %477 = vmatpush1.msra.mxu0 0.0
        %478 = vmatprep.subr.mxu0 0.0
        %479 = vmatpush1.msra.mxu0 0.0
        %480 = vmatprep.subr.mxu0 0.0
        %481 = vmatpush1.msra.mxu0 0.0
        %482 = vmatprep.subr.mxu0 0.0
        %483 = vmatpush1.msra.mxu0 0.0
        %484 = vmatprep.subr.mxu0 0.0
        %485 = vmatpush1.msra.mxu0 0.0
        %486 = vmatprep.subr.mxu0 0.0
        %487 = vmatpush1.msra.mxu0 0.0
        %488 = vmatprep.subr.mxu0 0.0
        %489 = vmatpush1.msra.mxu0 0.0
        %490 = vmatprep.subr.mxu0 0.0
        %491 = vmatpush1.msra.mxu0 0.0
        %492 = vmatprep.subr.mxu0 0.0
        %493 = vmatpush1.msra.mxu0 0.0
        %494 = vmatprep.subr.mxu0 0.0
        %495 = vmatpush1.msra.mxu0 0.0
        %496 = vmatprep.subr.mxu0 0.0
        %497 = vmatpush1.msra.mxu0 0.0
        %498 = vmatprep.mubr.f32.mxu0 0.0
        %499 = vmatmul.mubr.f32.gmra.mrb[0].mxu0 %v292
        %v500 = vpop.f32.mrb[0].mxu0
        %v501 = vadd.f32 0.0, %v500
        %v502 = vpop.f32.mrb[0].mxu0
        %503 = vdwg.mxu0
        %504 = vmatprep.subr.mxu0 0.0
        %505 = vmatpush1.msra.mxu0 %v287
        %506 = vmatprep.subr.mxu0 0.0
        %507 = vmatpush1.msra.mxu0 %v288
        %508 = vmatprep.subr.mxu0 0.0
        %509 = vmatpush1.msra.mxu0 %v289
        %510 = vmatprep.subr.mxu0 0.0
        %511 = vmatpush1.msra.mxu0 %v290
        %512 = vmatprep.subr.mxu0 0.0
        %513 = vmatpush1.msra.mxu0 0.0
        %514 = vmatprep.subr.mxu0 0.0
        %515 = vmatpush1.msra.mxu0 0.0
        %516 = vmatprep.subr.mxu0 0.0
        %517 = vmatpush1.msra.mxu0 0.0
        %518 = vmatprep.subr.mxu0 0.0
        %519 = vmatpush1.msra.mxu0 0.0
        %520 = vmatprep.subr.mxu0 0.0
        %521 = vmatpush1.msra.mxu0 0.0
        %522 = vmatprep.subr.mxu0 0.0
        %523 = vmatpush1.msra.mxu0 0.0
        %524 = vmatprep.subr.mxu0 0.0
        %525 = vmatpush1.msra.mxu0 0.0
        %526 = vmatprep.subr.mxu0 0.0
        %527 = vmatpush1.msra.mxu0 0.0
        %528 = vmatprep.subr.mxu0 0.0
        %529 = vmatpush1.msra.mxu0 0.0
        %530 = vmatprep.subr.mxu0 0.0
        %531 = vmatpush1.msra.mxu0 0.0
        %532 = vmatprep.subr.mxu0 0.0
        %533 = vmatpush1.msra.mxu0 0.0
        %534 = vmatprep.subr.mxu0 0.0
        %535 = vmatpush1.msra.mxu0 0.0
        %536 = vmatprep.subr.mxu0 0.0
        %537 = vmatpush1.msra.mxu0 0.0
        %538 = vmatprep.subr.mxu0 0.0
        %539 = vmatpush1.msra.mxu0 0.0
        %540 = vmatprep.subr.mxu0 0.0
        %541 = vmatpush1.msra.mxu0 0.0
        %542 = vmatprep.subr.mxu0 0.0
        %543 = vmatpush1.msra.mxu0 0.0
        %544 = vmatprep.subr.mxu0 0.0
        %545 = vmatpush1.msra.mxu0 0.0
        %546 = vmatprep.subr.mxu0 0.0
        %547 = vmatpush1.msra.mxu0 0.0
        %548 = vmatprep.subr.mxu0 0.0
        %549 = vmatpush1.msra.mxu0 0.0
        %550 = vmatprep.subr.mxu0 0.0
        %551 = vmatpush1.msra.mxu0 0.0
        %552 = vmatprep.subr.mxu0 0.0
        %553 = vmatpush1.msra.mxu0 0.0
        %554 = vmatprep.subr.mxu0 0.0
        %555 = vmatpush1.msra.mxu0 0.0
        %556 = vmatprep.subr.mxu0 0.0
        %557 = vmatpush1.msra.mxu0 0.0
        %558 = vmatprep.subr.mxu0 0.0
        %559 = vmatpush1.msra.mxu0 0.0
        %560 = vmatprep.subr.mxu0 0.0
        %561 = vmatpush1.msra.mxu0 0.0
        %562 = vmatprep.subr.mxu0 0.0
        %563 = vmatpush1.msra.mxu0 0.0
        %564 = vmatprep.subr.mxu0 0.0
        %565 = vmatpush1.msra.mxu0 0.0
        %566 = vmatprep.subr.mxu0 0.0
        %567 = vmatpush1.msra.mxu0 0.0
        %568 = vmatprep.mubr.f32.mxu0 0.0
        %569 = vmatmul.mubr.f32.gmra.mrb[0].mxu0 %v292
        %v570 = vpop.f32.mrb[0].mxu0
        %v571 = vadd.f32 0.0, %v570
        %v572 = vpop.f32.mrb[0].mxu0
        %573 = vdwg.mxu0
        %s574 = scalar_lea.vmem %s1, 128
        %v575 = vld [vmem:[%s574] sm:$0xff]
        %v576 = vld [vmem:[%s574 + $0x8] sm:$0xff]
        %v577 = vld [vmem:[%s574 + $0x10] sm:$0xff]
        %v578 = vld [vmem:[%s574 + $0x18] sm:$0xff]
        %v579 = vld [vmem:[%s574 + $0x20] sm:$0xff]
        %v580 = vld [vmem:[%s574 + $0x28] sm:$0xff]
        %v581 = vld [vmem:[%s574 + $0x30] sm:$0xff]
        %v582 = vld [vmem:[%s574 + $0x38] sm:$0xff]
        %v583 = vld [vmem:[%s574 + $0x40] sm:$0xff]
        %v584 = vld [vmem:[%s574 + $0x48] sm:$0xff]
        %v585 = vld [vmem:[%s574 + $0x50] sm:$0xff]
        %v586 = vld [vmem:[%s574 + $0x58] sm:$0xff]
        %v587 = vld [vmem:[%s574 + $0x60] sm:$0xff]
        %v588 = vld [vmem:[%s574 + $0x68] sm:$0xff]
        %v589 = vld [vmem:[%s574 + $0x70] sm:$0xff]
        %v590 = vld [vmem:[%s574 + $0x78] sm:$0xff]
        %591 = vmatprep.subr.mxu0 0.0
        %592 = vmatpush1.msra.mxu0 %v575
        %593 = vmatprep.subr.mxu0 0.0
        %594 = vmatpush1.msra.mxu0 %v576
        %595 = vmatprep.subr.mxu0 0.0
        %596 = vmatpush1.msra.mxu0 %v577
        %597 = vmatprep.subr.mxu0 0.0
        %598 = vmatpush1.msra.mxu0 %v578
        %599 = vmatprep.subr.mxu0 0.0
        %600 = vmatpush1.msra.mxu0 0.0
        %601 = vmatprep.subr.mxu0 0.0
        %602 = vmatpush1.msra.mxu0 0.0
        %603 = vmatprep.subr.mxu0 0.0
        %604 = vmatpush1.msra.mxu0 0.0
        %605 = vmatprep.subr.mxu0 0.0
        %606 = vmatpush1.msra.mxu0 0.0
        %607 = vmatprep.subr.mxu0 0.0
        %608 = vmatpush1.msra.mxu0 0.0
        %609 = vmatprep.subr.mxu0 0.0
        %610 = vmatpush1.msra.mxu0 0.0
        %611 = vmatprep.subr.mxu0 0.0
        %612 = vmatpush1.msra.mxu0 0.0
        %613 = vmatprep.subr.mxu0 0.0
        %614 = vmatpush1.msra.mxu0 0.0
        %615 = vmatprep.subr.mxu0 0.0
        %616 = vmatpush1.msra.mxu0 0.0
        %617 = vmatprep.subr.mxu0 0.0
        %618 = vmatpush1.msra.mxu0 0.0
        %619 = vmatprep.subr.mxu0 0.0
        %620 = vmatpush1.msra.mxu0 0.0
        %621 = vmatprep.subr.mxu0 0.0
        %622 = vmatpush1.msra.mxu0 0.0
        %623 = vmatprep.subr.mxu0 0.0
        %624 = vmatpush1.msra.mxu0 0.0
        %625 = vmatprep.subr.mxu0 0.0
        %626 = vmatpush1.msra.mxu0 0.0
        %627 = vmatprep.subr.mxu0 0.0
        %628 = vmatpush1.msra.mxu0 0.0
        %629 = vmatprep.subr.mxu0 0.0
        %630 = vmatpush1.msra.mxu0 0.0
        %631 = vmatprep.subr.mxu0 0.0
        %632 = vmatpush1.msra.mxu0 0.0
        %633 = vmatprep.subr.mxu0 0.0
        %634 = vmatpush1.msra.mxu0 0.0
        %635 = vmatprep.subr.mxu0 0.0
        %636 = vmatpush1.msra.mxu0 0.0
        %637 = vmatprep.subr.mxu0 0.0
        %638 = vmatpush1.msra.mxu0 0.0
        %639 = vmatprep.subr.mxu0 0.0
        %640 = vmatpush1.msra.mxu0 0.0
        %641 = vmatprep.subr.mxu0 0.0
        %642 = vmatpush1.msra.mxu0 0.0
        %643 = vmatprep.subr.mxu0 0.0
        %644 = vmatpush1.msra.mxu0 0.0
        %645 = vmatprep.subr.mxu0 0.0
        %646 = vmatpush1.msra.mxu0 0.0
        %647 = vmatprep.subr.mxu0 0.0
        %648 = vmatpush1.msra.mxu0 0.0
        %649 = vmatprep.subr.mxu0 0.0
        %650 = vmatpush1.msra.mxu0 0.0
        %651 = vmatprep.subr.mxu0 0.0
        %652 = vmatpush1.msra.mxu0 0.0
        %653 = vmatprep.subr.mxu0 0.0
        %654 = vmatpush1.msra.mxu0 0.0
        %655 = vmatprep.mubr.f32.mxu0 0.0
        %656 = vmatmul.mubr.f32.gmra.mrb[0].mxu0 %v292
        %v657 = vpop.f32.mrb[0].mxu0
        %v658 = vadd.f32 0.0, %v657
        %v659 = vpop.f32.mrb[0].mxu0
        %660 = vdwg.mxu0
        %661 = vmatprep.subr.mxu0 0.0
        %662 = vmatpush1.msra.mxu0 %v579
        %663 = vmatprep.subr.mxu0 0.0
        %664 = vmatpush1.msra.mxu0 %v580
        %665 = vmatprep.subr.mxu0 0.0
        %666 = vmatpush1.msra.mxu0 %v581
        %667 = vmatprep.subr.mxu0 0.0
        %668 = vmatpush1.msra.mxu0 %v582
        %669 = vmatprep.subr.mxu0 0.0
        %670 = vmatpush1.msra.mxu0 0.0
        %671 = vmatprep.subr.mxu0 0.0
        %672 = vmatpush1.msra.mxu0 0.0
        %673 = vmatprep.subr.mxu0 0.0
        %674 = vmatpush1.msra.mxu0 0.0
        %675 = vmatprep.subr.mxu0 0.0
        %676 = vmatpush1.msra.mxu0 0.0
        %677 = vmatprep.subr.mxu0 0.0
        %678 = vmatpush1.msra.mxu0 0.0
        %679 = vmatprep.subr.mxu0 0.0
        %680 = vmatpush1.msra.mxu0 0.0
        %681 = vmatprep.subr.mxu0 0.0
        %682 = vmatpush1.msra.mxu0 0.0
        %683 = vmatprep.subr.mxu0 0.0
        %684 = vmatpush1.msra.mxu0 0.0
        %685 = vmatprep.subr.mxu0 0.0
        %686 = vmatpush1.msra.mxu0 0.0
        %687 = vmatprep.subr.mxu0 0.0
        %688 = vmatpush1.msra.mxu0 0.0
        %689 = vmatprep.subr.mxu0 0.0
        %690 = vmatpush1.msra.mxu0 0.0
        %691 = vmatprep.subr.mxu0 0.0
        %692 = vmatpush1.msra.mxu0 0.0
        %693 = vmatprep.subr.mxu0 0.0
        %694 = vmatpush1.msra.mxu0 0.0
        %695 = vmatprep.subr.mxu0 0.0
        %696 = vmatpush1.msra.mxu0 0.0
        %697 = vmatprep.subr.mxu0 0.0
        %698 = vmatpush1.msra.mxu0 0.0
        %699 = vmatprep.subr.mxu0 0.0
        %700 = vmatpush1.msra.mxu0 0.0
        %701 = vmatprep.subr.mxu0 0.0
        %702 = vmatpush1.msra.mxu0 0.0
        %703 = vmatprep.subr.mxu0 0.0
        %704 = vmatpush1.msra.mxu0 0.0
        %705 = vmatprep.subr.mxu0 0.0
        %706 = vmatpush1.msra.mxu0 0.0
        %707 = vmatprep.subr.mxu0 0.0
        %708 = vmatpush1.msra.mxu0 0.0
        %709 = vmatprep.subr.mxu0 0.0
        %710 = vmatpush1.msra.mxu0 0.0
        %711 = vmatprep.subr.mxu0 0.0
        %712 = vmatpush1.msra.mxu0 0.0
        %713 = vmatprep.subr.mxu0 0.0
        %714 = vmatpush1.msra.mxu0 0.0
        %715 = vmatprep.subr.mxu0 0.0
        %716 = vmatpush1.msra.mxu0 0.0
        %717 = vmatprep.subr.mxu0 0.0
        %718 = vmatpush1.msra.mxu0 0.0
        %719 = vmatprep.subr.mxu0 0.0
        %720 = vmatpush1.msra.mxu0 0.0
        %721 = vmatprep.subr.mxu0 0.0
        %722 = vmatpush1.msra.mxu0 0.0
        %723 = vmatprep.subr.mxu0 0.0
        %724 = vmatpush1.msra.mxu0 0.0
        %725 = vmatprep.mubr.f32.mxu0 0.0
        %726 = vmatmul.mubr.f32.gmra.mrb[0].mxu0 %v292
        %v727 = vpop.f32.mrb[0].mxu0
        %v728 = vadd.f32 0.0, %v727
        %v729 = vpop.f32.mrb[0].mxu0
        %730 = vdwg.mxu0
        %731 = vmatprep.subr.mxu0 0.0
        %732 = vmatpush1.msra.mxu0 %v583
        %733 = vmatprep.subr.mxu0 0.0
        %734 = vmatpush1.msra.mxu0 %v584
        %735 = vmatprep.subr.mxu0 0.0
        %736 = vmatpush1.msra.mxu0 %v585
        %737 = vmatprep.subr.mxu0 0.0
        %738 = vmatpush1.msra.mxu0 %v586
        %739 = vmatprep.subr.mxu0 0.0
        %740 = vmatpush1.msra.mxu0 0.0
        %741 = vmatprep.subr.mxu0 0.0
        %742 = vmatpush1.msra.mxu0 0.0
        %743 = vmatprep.subr.mxu0 0.0
        %744 = vmatpush1.msra.mxu0 0.0
        %745 = vmatprep.subr.mxu0 0.0
        %746 = vmatpush1.msra.mxu0 0.0
        %747 = vmatprep.subr.mxu0 0.0
        %748 = vmatpush1.msra.mxu0 0.0
        %749 = vmatprep.subr.mxu0 0.0
        %750 = vmatpush1.msra.mxu0 0.0
        %751 = vmatprep.subr.mxu0 0.0
        %752 = vmatpush1.msra.mxu0 0.0
        %753 = vmatprep.subr.mxu0 0.0
        %754 = vmatpush1.msra.mxu0 0.0
        %755 = vmatprep.subr.mxu0 0.0
        %756 = vmatpush1.msra.mxu0 0.0
        %757 = vmatprep.subr.mxu0 0.0
        %758 = vmatpush1.msra.mxu0 0.0
        %759 = vmatprep.subr.mxu0 0.0
        %760 = vmatpush1.msra.mxu0 0.0
        %761 = vmatprep.subr.mxu0 0.0
        %762 = vmatpush1.msra.mxu0 0.0
        %763 = vmatprep.subr.mxu0 0.0
        %764 = vmatpush1.msra.mxu0 0.0
        %765 = vmatprep.subr.mxu0 0.0
        %766 = vmatpush1.msra.mxu0 0.0
        %767 = vmatprep.subr.mxu0 0.0
        %768 = vmatpush1.msra.mxu0 0.0
        %769 = vmatprep.subr.mxu0 0.0
        %770 = vmatpush1.msra.mxu0 0.0
        %771 = vmatprep.subr.mxu0 0.0
        %772 = vmatpush1.msra.mxu0 0.0
        %773 = vmatprep.subr.mxu0 0.0
        %774 = vmatpush1.msra.mxu0 0.0
        %775 = vmatprep.subr.mxu0 0.0
        %776 = vmatpush1.msra.mxu0 0.0
        %777 = vmatprep.subr.mxu0 0.0
        %778 = vmatpush1.msra.mxu0 0.0
        %779 = vmatprep.subr.mxu0 0.0
        %780 = vmatpush1.msra.mxu0 0.0
        %781 = vmatprep.subr.mxu0 0.0
        %782 = vmatpush1.msra.mxu0 0.0
        %783 = vmatprep.subr.mxu0 0.0
        %784 = vmatpush1.msra.mxu0 0.0
        %785 = vmatprep.subr.mxu0 0.0
        %786 = vmatpush1.msra.mxu0 0.0
        %787 = vmatprep.subr.mxu0 0.0
        %788 = vmatpush1.msra.mxu0 0.0
        %789 = vmatprep.subr.mxu0 0.0
        %790 = vmatpush1.msra.mxu0 0.0
        %791 = vmatprep.subr.mxu0 0.0
        %792 = vmatpush1.msra.mxu0 0.0
        %793 = vmatprep.subr.mxu0 0.0
        %794 = vmatpush1.msra.mxu0 0.0
        %795 = vmatprep.mubr.f32.mxu0 0.0
        %796 = vmatmul.mubr.f32.gmra.mrb[0].mxu0 %v292
        %v797 = vpop.f32.mrb[0].mxu0
        %v798 = vadd.f32 0.0, %v797
        %v799 = vpop.f32.mrb[0].mxu0
        %800 = vdwg.mxu0
        %801 = vmatprep.subr.mxu0 0.0
        %802 = vmatpush1.msra.mxu0 %v587
        %803 = vmatprep.subr.mxu0 0.0
        %804 = vmatpush1.msra.mxu0 %v588
        %805 = vmatprep.subr.mxu0 0.0
        %806 = vmatpush1.msra.mxu0 %v589
        %807 = vmatprep.subr.mxu0 0.0
        %808 = vmatpush1.msra.mxu0 %v590
        %809 = vmatprep.subr.mxu0 0.0
        %810 = vmatpush1.msra.mxu0 0.0
        %811 = vmatprep.subr.mxu0 0.0
        %812 = vmatpush1.msra.mxu0 0.0
        %813 = vmatprep.subr.mxu0 0.0
        %814 = vmatpush1.msra.mxu0 0.0
        %815 = vmatprep.subr.mxu0 0.0
        %816 = vmatpush1.msra.mxu0 0.0
        %817 = vmatprep.subr.mxu0 0.0
        %818 = vmatpush1.msra.mxu0 0.0
        %819 = vmatprep.subr.mxu0 0.0
        %820 = vmatpush1.msra.mxu0 0.0
        %821 = vmatprep.subr.mxu0 0.0
        %822 = vmatpush1.msra.mxu0 0.0
        %823 = vmatprep.subr.mxu0 0.0
        %824 = vmatpush1.msra.mxu0 0.0
        %825 = vmatprep.subr.mxu0 0.0
        %826 = vmatpush1.msra.mxu0 0.0
        %827 = vmatprep.subr.mxu0 0.0
        %828 = vmatpush1.msra.mxu0 0.0
        %829 = vmatprep.subr.mxu0 0.0
        %830 = vmatpush1.msra.mxu0 0.0
        %831 = vmatprep.subr.mxu0 0.0
        %832 = vmatpush1.msra.mxu0 0.0
        %833 = vmatprep.subr.mxu0 0.0
        %834 = vmatpush1.msra.mxu0 0.0
        %835 = vmatprep.subr.mxu0 0.0
        %836 = vmatpush1.msra.mxu0 0.0
        %837 = vmatprep.subr.mxu0 0.0
        %838 = vmatpush1.msra.mxu0 0.0
        %839 = vmatprep.subr.mxu0 0.0
        %840 = vmatpush1.msra.mxu0 0.0
        %841 = vmatprep.subr.mxu0 0.0
        %842 = vmatpush1.msra.mxu0 0.0
        %843 = vmatprep.subr.mxu0 0.0
        %844 = vmatpush1.msra.mxu0 0.0
        %845 = vmatprep.subr.mxu0 0.0
        %846 = vmatpush1.msra.mxu0 0.0
        %847 = vmatprep.subr.mxu0 0.0
        %848 = vmatpush1.msra.mxu0 0.0
        %849 = vmatprep.subr.mxu0 0.0
        %850 = vmatpush1.msra.mxu0 0.0
        %851 = vmatprep.subr.mxu0 0.0
        %852 = vmatpush1.msra.mxu0 0.0
        %853 = vmatprep.subr.mxu0 0.0
        %854 = vmatpush1.msra.mxu0 0.0
        %855 = vmatprep.subr.mxu0 0.0
        %856 = vmatpush1.msra.mxu0 0.0
        %857 = vmatprep.subr.mxu0 0.0
        %858 = vmatpush1.msra.mxu0 0.0
        %859 = vmatprep.subr.mxu0 0.0
        %860 = vmatpush1.msra.mxu0 0.0
        %861 = vmatprep.subr.mxu0 0.0
        %862 = vmatpush1.msra.mxu0 0.0
        %863 = vmatprep.subr.mxu0 0.0
        %864 = vmatpush1.msra.mxu0 0.0
        %865 = vmatprep.mubr.f32.mxu0 0.0
        %866 = vmatmul.mubr.f32.gmra.mrb[0].mxu0 %v292
        %v867 = vpop.f32.mrb[0].mxu0
        %v868 = vadd.f32 0.0, %v867
        %v869 = vpop.f32.mrb[0].mxu0
        %870 = vdwg.mxu0
        %s871 = scalar_lea.vmem %s1, 256
        %v872 = vld [vmem:[%s871] sm:$0xff]
        %v873 = vld [vmem:[%s871 + $0x8] sm:$0xff]
        %v874 = vld [vmem:[%s871 + $0x10] sm:$0xff]
        %v875 = vld [vmem:[%s871 + $0x18] sm:$0xff]
        %v876 = vld [vmem:[%s871 + $0x20] sm:$0xff]
        %v877 = vld [vmem:[%s871 + $0x28] sm:$0xff]
        %v878 = vld [vmem:[%s871 + $0x30] sm:$0xff]
        %v879 = vld [vmem:[%s871 + $0x38] sm:$0xff]
        %v880 = vld [vmem:[%s871 + $0x40] sm:$0xff]
        %v881 = vld [vmem:[%s871 + $0x48] sm:$0xff]
        %v882 = vld [vmem:[%s871 + $0x50] sm:$0xff]
        %v883 = vld [vmem:[%s871 + $0x58] sm:$0xff]
        %v884 = vld [vmem:[%s871 + $0x60] sm:$0xff]
        %v885 = vld [vmem:[%s871 + $0x68] sm:$0xff]
        %v886 = vld [vmem:[%s871 + $0x70] sm:$0xff]
        %v887 = vld [vmem:[%s871 + $0x78] sm:$0xff]
        %888 = vmatprep.subr.mxu0 0.0
        %889 = vmatpush1.msra.mxu0 %v872
        %890 = vmatprep.subr.mxu0 0.0
        %891 = vmatpush1.msra.mxu0 %v873
        %892 = vmatprep.subr.mxu0 0.0
        %893 = vmatpush1.msra.mxu0 %v874
        %894 = vmatprep.subr.mxu0 0.0
        %895 = vmatpush1.msra.mxu0 %v875
        %896 = vmatprep.subr.mxu0 0.0
        %897 = vmatpush1.msra.mxu0 0.0
        %898 = vmatprep.subr.mxu0 0.0
        %899 = vmatpush1.msra.mxu0 0.0
        %900 = vmatprep.subr.mxu0 0.0
        %901 = vmatpush1.msra.mxu0 0.0
        %902 = vmatprep.subr.mxu0 0.0
        %903 = vmatpush1.msra.mxu0 0.0
        %904 = vmatprep.subr.mxu0 0.0
        %905 = vmatpush1.msra.mxu0 0.0
        %906 = vmatprep.subr.mxu0 0.0
        %907 = vmatpush1.msra.mxu0 0.0
        %908 = vmatprep.subr.mxu0 0.0
        %909 = vmatpush1.msra.mxu0 0.0
        %910 = vmatprep.subr.mxu0 0.0
        %911 = vmatpush1.msra.mxu0 0.0
        %912 = vmatprep.subr.mxu0 0.0
        %913 = vmatpush1.msra.mxu0 0.0
        %914 = vmatprep.subr.mxu0 0.0
        %915 = vmatpush1.msra.mxu0 0.0
        %916 = vmatprep.subr.mxu0 0.0
        %917 = vmatpush1.msra.mxu0 0.0
        %918 = vmatprep.subr.mxu0 0.0
        %919 = vmatpush1.msra.mxu0 0.0
        %920 = vmatprep.subr.mxu0 0.0
        %921 = vmatpush1.msra.mxu0 0.0
        %922 = vmatprep.subr.mxu0 0.0
        %923 = vmatpush1.msra.mxu0 0.0
        %924 = vmatprep.subr.mxu0 0.0
        %925 = vmatpush1.msra.mxu0 0.0
        %926 = vmatprep.subr.mxu0 0.0
        %927 = vmatpush1.msra.mxu0 0.0
        %928 = vmatprep.subr.mxu0 0.0
        %929 = vmatpush1.msra.mxu0 0.0
        %930 = vmatprep.subr.mxu0 0.0
        %931 = vmatpush1.msra.mxu0 0.0
        %932 = vmatprep.subr.mxu0 0.0
        %933 = vmatpush1.msra.mxu0 0.0
        %934 = vmatprep.subr.mxu0 0.0
        %935 = vmatpush1.msra.mxu0 0.0
        %936 = vmatprep.subr.mxu0 0.0
        %937 = vmatpush1.msra.mxu0 0.0
        %938 = vmatprep.subr.mxu0 0.0
        %939 = vmatpush1.msra.mxu0 0.0
        %940 = vmatprep.subr.mxu0 0.0
        %941 = vmatpush1.msra.mxu0 0.0
        %942 = vmatprep.subr.mxu0 0.0
        %943 = vmatpush1.msra.mxu0 0.0
        %944 = vmatprep.subr.mxu0 0.0
        %945 = vmatpush1.msra.mxu0 0.0
        %946 = vmatprep.subr.mxu0 0.0
        %947 = vmatpush1.msra.mxu0 0.0
        %948 = vmatprep.subr.mxu0 0.0
        %949 = vmatpush1.msra.mxu0 0.0
        %950 = vmatprep.subr.mxu0 0.0
        %951 = vmatpush1.msra.mxu0 0.0
        %952 = vmatprep.mubr.f32.mxu0 0.0
        %953 = vmatmul.mubr.f32.gmra.mrb[0].mxu0 %v292
        %v954 = vpop.f32.mrb[0].mxu0
        %v955 = vadd.f32 0.0, %v954
        %v956 = vpop.f32.mrb[0].mxu0
        %957 = vdwg.mxu0
        %958 = vmatprep.subr.mxu0 0.0
        %959 = vmatpush1.msra.mxu0 %v876
        %960 = vmatprep.subr.mxu0 0.0
        %961 = vmatpush1.msra.mxu0 %v877
        %962 = vmatprep.subr.mxu0 0.0
        %963 = vmatpush1.msra.mxu0 %v878
        %964 = vmatprep.subr.mxu0 0.0
        %965 = vmatpush1.msra.mxu0 %v879
        %966 = vmatprep.subr.mxu0 0.0
        %967 = vmatpush1.msra.mxu0 0.0
        %968 = vmatprep.subr.mxu0 0.0
        %969 = vmatpush1.msra.mxu0 0.0
        %970 = vmatprep.subr.mxu0 0.0
        %971 = vmatpush1.msra.mxu0 0.0
        %972 = vmatprep.subr.mxu0 0.0
        %973 = vmatpush1.msra.mxu0 0.0
        %974 = vmatprep.subr.mxu0 0.0
        %975 = vmatpush1.msra.mxu0 0.0
        %976 = vmatprep.subr.mxu0 0.0
        %977 = vmatpush1.msra.mxu0 0.0
        %978 = vmatprep.subr.mxu0 0.0
        %979 = vmatpush1.msra.mxu0 0.0
        %980 = vmatprep.subr.mxu0 0.0
        %981 = vmatpush1.msra.mxu0 0.0
        %982 = vmatprep.subr.mxu0 0.0
        %983 = vmatpush1.msra.mxu0 0.0
        %984 = vmatprep.subr.mxu0 0.0
        %985 = vmatpush1.msra.mxu0 0.0
        %986 = vmatprep.subr.mxu0 0.0
        %987 = vmatpush1.msra.mxu0 0.0
        %988 = vmatprep.subr.mxu0 0.0
        %989 = vmatpush1.msra.mxu0 0.0
        %990 = vmatprep.subr.mxu0 0.0
        %991 = vmatpush1.msra.mxu0 0.0
        %992 = vmatprep.subr.mxu0 0.0
        %993 = vmatpush1.msra.mxu0 0.0
        %994 = vmatprep.subr.mxu0 0.0
        %995 = vmatpush1.msra.mxu0 0.0
        %996 = vmatprep.subr.mxu0 0.0
        %997 = vmatpush1.msra.mxu0 0.0
        %998 = vmatprep.subr.mxu0 0.0
        %999 = vmatpush1.msra.mxu0 0.0
        %1000 = vmatprep.subr.mxu0 0.0
        %1001 = vmatpush1.msra.mxu0 0.0
        %1002 = vmatprep.subr.mxu0 0.0
        %1003 = vmatpush1.msra.mxu0 0.0
        %1004 = vmatprep.subr.mxu0 0.0
        %1005 = vmatpush1.msra.mxu0 0.0
        %1006 = vmatprep.subr.mxu0 0.0
        %1007 = vmatpush1.msra.mxu0 0.0
        %1008 = vmatprep.subr.mxu0 0.0
        %1009 = vmatpush1.msra.mxu0 0.0
        %1010 = vmatprep.subr.mxu0 0.0
        %1011 = vmatpush1.msra.mxu0 0.0
        %1012 = vmatprep.subr.mxu0 0.0
        %1013 = vmatpush1.msra.mxu0 0.0
        %1014 = vmatprep.subr.mxu0 0.0
        %1015 = vmatpush1.msra.mxu0 0.0
        %1016 = vmatprep.subr.mxu0 0.0
        %1017 = vmatpush1.msra.mxu0 0.0
        %1018 = vmatprep.subr.mxu0 0.0
        %1019 = vmatpush1.msra.mxu0 0.0
        %1020 = vmatprep.subr.mxu0 0.0
        %1021 = vmatpush1.msra.mxu0 0.0
        %1022 = vmatprep.mubr.f32.mxu0 0.0
        %1023 = vmatmul.mubr.f32.gmra.mrb[0].mxu0 %v292
        %v1024 = vpop.f32.mrb[0].mxu0
        %v1025 = vadd.f32 0.0, %v1024
        %v1026 = vpop.f32.mrb[0].mxu0
        %1027 = vdwg.mxu0
        %1028 = vmatprep.subr.mxu0 0.0
        %1029 = vmatpush1.msra.mxu0 %v880
        %1030 = vmatprep.subr.mxu0 0.0
        %1031 = vmatpush1.msra.mxu0 %v881
        %1032 = vmatprep.subr.mxu0 0.0
        %1033 = vmatpush1.msra.mxu0 %v882
        %1034 = vmatprep.subr.mxu0 0.0
        %1035 = vmatpush1.msra.mxu0 %v883
        %1036 = vmatprep.subr.mxu0 0.0
        %1037 = vmatpush1.msra.mxu0 0.0
        %1038 = vmatprep.subr.mxu0 0.0
        %1039 = vmatpush1.msra.mxu0 0.0
        %1040 = vmatprep.subr.mxu0 0.0
        %1041 = vmatpush1.msra.mxu0 0.0
        %1042 = vmatprep.subr.mxu0 0.0
        %1043 = vmatpush1.msra.mxu0 0.0
        %1044 = vmatprep.subr.mxu0 0.0
        %1045 = vmatpush1.msra.mxu0 0.0
        %1046 = vmatprep.subr.mxu0 0.0
        %1047 = vmatpush1.msra.mxu0 0.0
        %1048 = vmatprep.subr.mxu0 0.0
        %1049 = vmatpush1.msra.mxu0 0.0
        %1050 = vmatprep.subr.mxu0 0.0
        %1051 = vmatpush1.msra.mxu0 0.0
        %1052 = vmatprep.subr.mxu0 0.0
        %1053 = vmatpush1.msra.mxu0 0.0
        %1054 = vmatprep.subr.mxu0 0.0
        %1055 = vmatpush1.msra.mxu0 0.0
        %1056 = vmatprep.subr.mxu0 0.0
        %1057 = vmatpush1.msra.mxu0 0.0
        %1058 = vmatprep.subr.mxu0 0.0
        %1059 = vmatpush1.msra.mxu0 0.0
        %1060 = vmatprep.subr.mxu0 0.0
        %1061 = vmatpush1.msra.mxu0 0.0
        %1062 = vmatprep.subr.mxu0 0.0
        %1063 = vmatpush1.msra.mxu0 0.0
        %1064 = vmatprep.subr.mxu0 0.0
        %1065 = vmatpush1.msra.mxu0 0.0
        %1066 = vmatprep.subr.mxu0 0.0
        %1067 = vmatpush1.msra.mxu0 0.0
        %1068 = vmatprep.subr.mxu0 0.0
        %1069 = vmatpush1.msra.mxu0 0.0
        %1070 = vmatprep.subr.mxu0 0.0
        %1071 = vmatpush1.msra.mxu0 0.0
        %1072 = vmatprep.subr.mxu0 0.0
        %1073 = vmatpush1.msra.mxu0 0.0
        %1074 = vmatprep.subr.mxu0 0.0
        %1075 = vmatpush1.msra.mxu0 0.0
        %1076 = vmatprep.subr.mxu0 0.0
        %1077 = vmatpush1.msra.mxu0 0.0
        %1078 = vmatprep.subr.mxu0 0.0
        %1079 = vmatpush1.msra.mxu0 0.0
        %1080 = vmatprep.subr.mxu0 0.0
        %1081 = vmatpush1.msra.mxu0 0.0
        %1082 = vmatprep.subr.mxu0 0.0
        %1083 = vmatpush1.msra.mxu0 0.0
        %1084 = vmatprep.subr.mxu0 0.0
        %1085 = vmatpush1.msra.mxu0 0.0
        %1086 = vmatprep.subr.mxu0 0.0
        %1087 = vmatpush1.msra.mxu0 0.0
        %1088 = vmatprep.subr.mxu0 0.0
        %1089 = vmatpush1.msra.mxu0 0.0
        %1090 = vmatprep.subr.mxu0 0.0
        %1091 = vmatpush1.msra.mxu0 0.0
        %1092 = vmatprep.mubr.f32.mxu0 0.0
        %1093 = vmatmul.mubr.f32.gmra.mrb[0].mxu0 %v292
        %v1094 = vpop.f32.mrb[0].mxu0
        %v1095 = vadd.f32 0.0, %v1094
        %v1096 = vpop.f32.mrb[0].mxu0
        %1097 = vdwg.mxu0
        %1098 = vmatprep.subr.mxu0 0.0
        %1099 = vmatpush1.msra.mxu0 %v884
        %1100 = vmatprep.subr.mxu0 0.0
        %1101 = vmatpush1.msra.mxu0 %v885
        %1102 = vmatprep.subr.mxu0 0.0
        %1103 = vmatpush1.msra.mxu0 %v886
        %1104 = vmatprep.subr.mxu0 0.0
        %1105 = vmatpush1.msra.mxu0 %v887
        %1106 = vmatprep.subr.mxu0 0.0
        %1107 = vmatpush1.msra.mxu0 0.0
        %1108 = vmatprep.subr.mxu0 0.0
        %1109 = vmatpush1.msra.mxu0 0.0
        %1110 = vmatprep.subr.mxu0 0.0
        %1111 = vmatpush1.msra.mxu0 0.0
        %1112 = vmatprep.subr.mxu0 0.0
        %1113 = vmatpush1.msra.mxu0 0.0
        %1114 = vmatprep.subr.mxu0 0.0
        %1115 = vmatpush1.msra.mxu0 0.0
        %1116 = vmatprep.subr.mxu0 0.0
        %1117 = vmatpush1.msra.mxu0 0.0
        %1118 = vmatprep.subr.mxu0 0.0
        %1119 = vmatpush1.msra.mxu0 0.0
        %1120 = vmatprep.subr.mxu0 0.0
        %1121 = vmatpush1.msra.mxu0 0.0
        %1122 = vmatprep.subr.mxu0 0.0
        %1123 = vmatpush1.msra.mxu0 0.0
        %1124 = vmatprep.subr.mxu0 0.0
        %1125 = vmatpush1.msra.mxu0 0.0
        %1126 = vmatprep.subr.mxu0 0.0
        %1127 = vmatpush1.msra.mxu0 0.0
        %1128 = vmatprep.subr.mxu0 0.0
        %1129 = vmatpush1.msra.mxu0 0.0
        %1130 = vmatprep.subr.mxu0 0.0
        %1131 = vmatpush1.msra.mxu0 0.0
        %1132 = vmatprep.subr.mxu0 0.0
        %1133 = vmatpush1.msra.mxu0 0.0
        %1134 = vmatprep.subr.mxu0 0.0
        %1135 = vmatpush1.msra.mxu0 0.0
        %1136 = vmatprep.subr.mxu0 0.0
        %1137 = vmatpush1.msra.mxu0 0.0
        %1138 = vmatprep.subr.mxu0 0.0
        %1139 = vmatpush1.msra.mxu0 0.0
        %1140 = vmatprep.subr.mxu0 0.0
        %1141 = vmatpush1.msra.mxu0 0.0
        %1142 = vmatprep.subr.mxu0 0.0
        %1143 = vmatpush1.msra.mxu0 0.0
        %1144 = vmatprep.subr.mxu0 0.0
        %1145 = vmatpush1.msra.mxu0 0.0
        %1146 = vmatprep.subr.mxu0 0.0
        %1147 = vmatpush1.msra.mxu0 0.0
        %1148 = vmatprep.subr.mxu0 0.0
        %1149 = vmatpush1.msra.mxu0 0.0
        %1150 = vmatprep.subr.mxu0 0.0
        %1151 = vmatpush1.msra.mxu0 0.0
        %1152 = vmatprep.subr.mxu0 0.0
        %1153 = vmatpush1.msra.mxu0 0.0
        %1154 = vmatprep.subr.mxu0 0.0
        %1155 = vmatpush1.msra.mxu0 0.0
        %1156 = vmatprep.subr.mxu0 0.0
        %1157 = vmatpush1.msra.mxu0 0.0
        %1158 = vmatprep.subr.mxu0 0.0
        %1159 = vmatpush1.msra.mxu0 0.0
        %1160 = vmatprep.subr.mxu0 0.0
        %1161 = vmatpush1.msra.mxu0 0.0
        %1162 = vmatprep.mubr.f32.mxu0 0.0
        %1163 = vmatmul.mubr.f32.gmra.mrb[0].mxu0 %v292
        %v1164 = vpop.f32.mrb[0].mxu0
        %v1165 = vadd.f32 0.0, %v1164
        %v1166 = vpop.f32.mrb[0].mxu0
        %1167 = vdwg.mxu0
        %vm1168 = vcmask 64512
        %v1170 = vsel %vm1168, %v361, 0
        %v1173 = vsel %vm1168, %v658, 0
        %1175 = vmatprep.subr.mxu0 0.0
        %1176 = vmatpush1.xpose.msra.mxu0 %v1173
        %1177 = vmatprep.subr.mxu0 0.0
        %1178 = vmatpush1.xpose.msra.mxu0 0.0
        %1179 = vmatprep.subr.mxu0 0.0
        %1180 = vmatpush1.xpose.msra.mxu0 0.0
        %1181 = vmatprep.subr.mxu0 0.0
        %1182 = vmatpush1.xpose.msra.mxu0 0.0
        %1183 = vmatprep.subr.mxu0 0.0
        %1184 = vmatpush1.xpose.msra.mxu0 0.0
        %1185 = vmatprep.subr.mxu0 0.0
        %1186 = vmatpush1.xpose.msra.mxu0 0.0
        %1187 = vmatprep.subr.mxu0 0.0
        %1188 = vmatpush1.xpose.msra.mxu0 0.0
        %1189 = vmatprep.subr.mxu0 0.0
        %1190 = vmatpush1.xpose.msra.mxu0 0.0
        %1191 = vmatprep.subr.mxu0 0.0
        %1192 = vmatpush1.xpose.msra.mxu0 0.0
        %1193 = vmatprep.subr.mxu0 0.0
        %1194 = vmatpush1.xpose.msra.mxu0 0.0
        %1195 = vmatprep.subr.mxu0 0.0
        %1196 = vmatpush1.xpose.msra.mxu0 0.0
        %1197 = vmatprep.subr.mxu0 0.0
        %1198 = vmatpush1.xpose.msra.mxu0 0.0
        %1199 = vmatprep.subr.mxu0 0.0
        %1200 = vmatpush1.xpose.msra.mxu0 0.0
        %1201 = vmatprep.subr.mxu0 0.0
        %1202 = vmatpush1.xpose.msra.mxu0 0.0
        %1203 = vmatprep.subr.mxu0 0.0
        %1204 = vmatpush1.xpose.msra.mxu0 0.0
        %1205 = vmatprep.subr.mxu0 0.0
        %1206 = vmatpush1.xpose.msra.mxu0 0.0
        %1207 = vmatprep.subr.mxu0 0.0
        %1208 = vmatpush1.xpose.msra.mxu0 0.0
        %1209 = vmatprep.subr.mxu0 0.0
        %1210 = vmatpush1.xpose.msra.mxu0 0.0
        %1211 = vmatprep.subr.mxu0 0.0
        %1212 = vmatpush1.xpose.msra.mxu0 0.0
        %1213 = vmatprep.subr.mxu0 0.0
        %1214 = vmatpush1.xpose.msra.mxu0 0.0
        %1215 = vmatprep.subr.mxu0 0.0
        %1216 = vmatpush1.xpose.msra.mxu0 0.0
        %1217 = vmatprep.subr.mxu0 0.0
        %1218 = vmatpush1.xpose.msra.mxu0 0.0
        %1219 = vmatprep.subr.mxu0 0.0
        %1220 = vmatpush1.xpose.msra.mxu0 0.0
        %1221 = vmatprep.subr.mxu0 0.0
        %1222 = vmatpush1.xpose.msra.mxu0 0.0
        %1223 = vmatprep.subr.mxu0 0.0
        %1224 = vmatpush1.xpose.msra.mxu0 0.0
        %1225 = vmatprep.subr.mxu0 0.0
        %1226 = vmatpush1.xpose.msra.mxu0 0.0
        %1227 = vmatprep.subr.mxu0 0.0
        %1228 = vmatpush1.xpose.msra.mxu0 0.0
        %1229 = vmatprep.subr.mxu0 0.0
        %1230 = vmatpush1.xpose.msra.mxu0 0.0
        %1231 = vmatprep.subr.mxu0 0.0
        %1232 = vmatpush1.xpose.msra.mxu0 0.0
        %1233 = vmatprep.subr.mxu0 0.0
        %1234 = vmatpush1.xpose.msra.mxu0 0.0
        %1235 = vmatprep.subr.mxu0 0.0
        %1236 = vmatpush1.xpose.msra.mxu0 0.0
        %1237 = vmatprep.subr.mxu0 0.0
        %1238 = vmatpush1.xpose.msra.mxu0 0.0
        %1239 = vmatprep.mubr.f32.mxu0 0.0
        %1240 = vmatmul.mubr.f32.gmra.mrb[0].mxu0 %v1170
        %v1241 = vpop.f32.mrb[0].mxu0
        %v1242 = vadd.f32 0.0, %v1241
        %v1243 = vpop.f32.mrb[0].mxu0
        %1244 = vdwg.mxu0
        %v1246 = vsel %vm1168, %v431, 0
        %v1249 = vsel %vm1168, %v728, 0
        %1251 = vmatprep.subr.mxu0 0.0
        %1252 = vmatpush1.xpose.msra.mxu0 %v1249
        %1253 = vmatprep.subr.mxu0 0.0
        %1254 = vmatpush1.xpose.msra.mxu0 0.0
        %1255 = vmatprep.subr.mxu0 0.0
        %1256 = vmatpush1.xpose.msra.mxu0 0.0
        %1257 = vmatprep.subr.mxu0 0.0
        %1258 = vmatpush1.xpose.msra.mxu0 0.0
        %1259 = vmatprep.subr.mxu0 0.0
        %1260 = vmatpush1.xpose.msra.mxu0 0.0
        %1261 = vmatprep.subr.mxu0 0.0
        %1262 = vmatpush1.xpose.msra.mxu0 0.0
        %1263 = vmatprep.subr.mxu0 0.0
        %1264 = vmatpush1.xpose.msra.mxu0 0.0
        %1265 = vmatprep.subr.mxu0 0.0
        %1266 = vmatpush1.xpose.msra.mxu0 0.0
        %1267 = vmatprep.subr.mxu0 0.0
        %1268 = vmatpush1.xpose.msra.mxu0 0.0
        %1269 = vmatprep.subr.mxu0 0.0
        %1270 = vmatpush1.xpose.msra.mxu0 0.0
        %1271 = vmatprep.subr.mxu0 0.0
        %1272 = vmatpush1.xpose.msra.mxu0 0.0
        %1273 = vmatprep.subr.mxu0 0.0
        %1274 = vmatpush1.xpose.msra.mxu0 0.0
        %1275 = vmatprep.subr.mxu0 0.0
        %1276 = vmatpush1.xpose.msra.mxu0 0.0
        %1277 = vmatprep.subr.mxu0 0.0
        %1278 = vmatpush1.xpose.msra.mxu0 0.0
        %1279 = vmatprep.subr.mxu0 0.0
        %1280 = vmatpush1.xpose.msra.mxu0 0.0
        %1281 = vmatprep.subr.mxu0 0.0
        %1282 = vmatpush1.xpose.msra.mxu0 0.0
        %1283 = vmatprep.subr.mxu0 0.0
        %1284 = vmatpush1.xpose.msra.mxu0 0.0
        %1285 = vmatprep.subr.mxu0 0.0
        %1286 = vmatpush1.xpose.msra.mxu0 0.0
        %1287 = vmatprep.subr.mxu0 0.0
        %1288 = vmatpush1.xpose.msra.mxu0 0.0
        %1289 = vmatprep.subr.mxu0 0.0
        %1290 = vmatpush1.xpose.msra.mxu0 0.0
        %1291 = vmatprep.subr.mxu0 0.0
        %1292 = vmatpush1.xpose.msra.mxu0 0.0
        %1293 = vmatprep.subr.mxu0 0.0
        %1294 = vmatpush1.xpose.msra.mxu0 0.0
        %1295 = vmatprep.subr.mxu0 0.0
        %1296 = vmatpush1.xpose.msra.mxu0 0.0
        %1297 = vmatprep.subr.mxu0 0.0
        %1298 = vmatpush1.xpose.msra.mxu0 0.0
        %1299 = vmatprep.subr.mxu0 0.0
        %1300 = vmatpush1.xpose.msra.mxu0 0.0
        %1301 = vmatprep.subr.mxu0 0.0
        %1302 = vmatpush1.xpose.msra.mxu0 0.0
        %1303 = vmatprep.subr.mxu0 0.0
        %1304 = vmatpush1.xpose.msra.mxu0 0.0
        %1305 = vmatprep.subr.mxu0 0.0
        %1306 = vmatpush1.xpose.msra.mxu0 0.0
        %1307 = vmatprep.subr.mxu0 0.0
        %1308 = vmatpush1.xpose.msra.mxu0 0.0
        %1309 = vmatprep.subr.mxu0 0.0
        %1310 = vmatpush1.xpose.msra.mxu0 0.0
        %1311 = vmatprep.subr.mxu0 0.0
        %1312 = vmatpush1.xpose.msra.mxu0 0.0
        %1313 = vmatprep.subr.mxu0 0.0
        %1314 = vmatpush1.xpose.msra.mxu0 0.0
        %1315 = vmatprep.mubr.f32.mxu0 0.0
        %1316 = vmatmul.mubr.f32.gmra.mrb[0].mxu0 %v1246
        %v1317 = vpop.f32.mrb[0].mxu0
        %v1318 = vadd.f32 0.0, %v1317
        %v1319 = vpop.f32.mrb[0].mxu0
        %1320 = vdwg.mxu0
        %v1322 = vsel %vm1168, %v501, 0
        %v1325 = vsel %vm1168, %v798, 0
        %1327 = vmatprep.subr.mxu0 0.0
        %1328 = vmatpush1.xpose.msra.mxu0 %v1325
        %1329 = vmatprep.subr.mxu0 0.0
        %1330 = vmatpush1.xpose.msra.mxu0 0.0
        %1331 = vmatprep.subr.mxu0 0.0
        %1332 = vmatpush1.xpose.msra.mxu0 0.0
        %1333 = vmatprep.subr.mxu0 0.0
        %1334 = vmatpush1.xpose.msra.mxu0 0.0
        %1335 = vmatprep.subr.mxu0 0.0
        %1336 = vmatpush1.xpose.msra.mxu0 0.0
        %1337 = vmatprep.subr.mxu0 0.0
        %1338 = vmatpush1.xpose.msra.mxu0 0.0
        %1339 = vmatprep.subr.mxu0 0.0
        %1340 = vmatpush1.xpose.msra.mxu0 0.0
        %1341 = vmatprep.subr.mxu0 0.0
        %1342 = vmatpush1.xpose.msra.mxu0 0.0
        %1343 = vmatprep.subr.mxu0 0.0
        %1344 = vmatpush1.xpose.msra.mxu0 0.0
        %1345 = vmatprep.subr.mxu0 0.0
        %1346 = vmatpush1.xpose.msra.mxu0 0.0
        %1347 = vmatprep.subr.mxu0 0.0
        %1348 = vmatpush1.xpose.msra.mxu0 0.0
        %1349 = vmatprep.subr.mxu0 0.0
        %1350 = vmatpush1.xpose.msra.mxu0 0.0
        %1351 = vmatprep.subr.mxu0 0.0
        %1352 = vmatpush1.xpose.msra.mxu0 0.0
        %1353 = vmatprep.subr.mxu0 0.0
        %1354 = vmatpush1.xpose.msra.mxu0 0.0
        %1355 = vmatprep.subr.mxu0 0.0
        %1356 = vmatpush1.xpose.msra.mxu0 0.0
        %1357 = vmatprep.subr.mxu0 0.0
        %1358 = vmatpush1.xpose.msra.mxu0 0.0
        %1359 = vmatprep.subr.mxu0 0.0
        %1360 = vmatpush1.xpose.msra.mxu0 0.0
        %1361 = vmatprep.subr.mxu0 0.0
        %1362 = vmatpush1.xpose.msra.mxu0 0.0
        %1363 = vmatprep.subr.mxu0 0.0
        %1364 = vmatpush1.xpose.msra.mxu0 0.0
        %1365 = vmatprep.subr.mxu0 0.0
        %1366 = vmatpush1.xpose.msra.mxu0 0.0
        %1367 = vmatprep.subr.mxu0 0.0
        %1368 = vmatpush1.xpose.msra.mxu0 0.0
        %1369 = vmatprep.subr.mxu0 0.0
        %1370 = vmatpush1.xpose.msra.mxu0 0.0
        %1371 = vmatprep.subr.mxu0 0.0
        %1372 = vmatpush1.xpose.msra.mxu0 0.0
        %1373 = vmatprep.subr.mxu0 0.0
        %1374 = vmatpush1.xpose.msra.mxu0 0.0
        %1375 = vmatprep.subr.mxu0 0.0
        %1376 = vmatpush1.xpose.msra.mxu0 0.0
        %1377 = vmatprep.subr.mxu0 0.0
        %1378 = vmatpush1.xpose.msra.mxu0 0.0
        %1379 = vmatprep.subr.mxu0 0.0
        %1380 = vmatpush1.xpose.msra.mxu0 0.0
        %1381 = vmatprep.subr.mxu0 0.0
        %1382 = vmatpush1.xpose.msra.mxu0 0.0
        %1383 = vmatprep.subr.mxu0 0.0
        %1384 = vmatpush1.xpose.msra.mxu0 0.0
        %1385 = vmatprep.subr.mxu0 0.0
        %1386 = vmatpush1.xpose.msra.mxu0 0.0
        %1387 = vmatprep.subr.mxu0 0.0
        %1388 = vmatpush1.xpose.msra.mxu0 0.0
        %1389 = vmatprep.subr.mxu0 0.0
        %1390 = vmatpush1.xpose.msra.mxu0 0.0
        %1391 = vmatprep.mubr.f32.mxu0 0.0
        %1392 = vmatmul.mubr.f32.gmra.mrb[0].mxu0 %v1322
        %v1393 = vpop.f32.mrb[0].mxu0
        %v1394 = vadd.f32 0.0, %v1393
        %v1395 = vpop.f32.mrb[0].mxu0
        %1396 = vdwg.mxu0
        %v1398 = vsel %vm1168, %v571, 0
        %v1401 = vsel %vm1168, %v868, 0
        %1403 = vmatprep.subr.mxu0 0.0
        %1404 = vmatpush1.xpose.msra.mxu0 %v1401
        %1405 = vmatprep.subr.mxu0 0.0
        %1406 = vmatpush1.xpose.msra.mxu0 0.0
        %1407 = vmatprep.subr.mxu0 0.0
        %1408 = vmatpush1.xpose.msra.mxu0 0.0
        %1409 = vmatprep.subr.mxu0 0.0
        %1410 = vmatpush1.xpose.msra.mxu0 0.0
        %1411 = vmatprep.subr.mxu0 0.0
        %1412 = vmatpush1.xpose.msra.mxu0 0.0
        %1413 = vmatprep.subr.mxu0 0.0
        %1414 = vmatpush1.xpose.msra.mxu0 0.0
        %1415 = vmatprep.subr.mxu0 0.0
        %1416 = vmatpush1.xpose.msra.mxu0 0.0
        %1417 = vmatprep.subr.mxu0 0.0
        %1418 = vmatpush1.xpose.msra.mxu0 0.0
        %1419 = vmatprep.subr.mxu0 0.0
        %1420 = vmatpush1.xpose.msra.mxu0 0.0
        %1421 = vmatprep.subr.mxu0 0.0
        %1422 = vmatpush1.xpose.msra.mxu0 0.0
        %1423 = vmatprep.subr.mxu0 0.0
        %1424 = vmatpush1.xpose.msra.mxu0 0.0
        %1425 = vmatprep.subr.mxu0 0.0
        %1426 = vmatpush1.xpose.msra.mxu0 0.0
        %1427 = vmatprep.subr.mxu0 0.0
        %1428 = vmatpush1.xpose.msra.mxu0 0.0
        %1429 = vmatprep.subr.mxu0 0.0
        %1430 = vmatpush1.xpose.msra.mxu0 0.0
        %1431 = vmatprep.subr.mxu0 0.0
        %1432 = vmatpush1.xpose.msra.mxu0 0.0
        %1433 = vmatprep.subr.mxu0 0.0
        %1434 = vmatpush1.xpose.msra.mxu0 0.0
        %1435 = vmatprep.subr.mxu0 0.0
        %1436 = vmatpush1.xpose.msra.mxu0 0.0
        %1437 = vmatprep.subr.mxu0 0.0
        %1438 = vmatpush1.xpose.msra.mxu0 0.0
        %1439 = vmatprep.subr.mxu0 0.0
        %1440 = vmatpush1.xpose.msra.mxu0 0.0
        %1441 = vmatprep.subr.mxu0 0.0
        %1442 = vmatpush1.xpose.msra.mxu0 0.0
        %1443 = vmatprep.subr.mxu0 0.0
        %1444 = vmatpush1.xpose.msra.mxu0 0.0
        %1445 = vmatprep.subr.mxu0 0.0
        %1446 = vmatpush1.xpose.msra.mxu0 0.0
        %1447 = vmatprep.subr.mxu0 0.0
        %1448 = vmatpush1.xpose.msra.mxu0 0.0
        %1449 = vmatprep.subr.mxu0 0.0
        %1450 = vmatpush1.xpose.msra.mxu0 0.0
        %1451 = vmatprep.subr.mxu0 0.0
        %1452 = vmatpush1.xpose.msra.mxu0 0.0
        %1453 = vmatprep.subr.mxu0 0.0
        %1454 = vmatpush1.xpose.msra.mxu0 0.0
        %1455 = vmatprep.subr.mxu0 0.0
        %1456 = vmatpush1.xpose.msra.mxu0 0.0
        %1457 = vmatprep.subr.mxu0 0.0
        %1458 = vmatpush1.xpose.msra.mxu0 0.0
        %1459 = vmatprep.subr.mxu0 0.0
        %1460 = vmatpush1.xpose.msra.mxu0 0.0
        %1461 = vmatprep.subr.mxu0 0.0
        %1462 = vmatpush1.xpose.msra.mxu0 0.0
        %1463 = vmatprep.subr.mxu0 0.0
        %1464 = vmatpush1.xpose.msra.mxu0 0.0
        %1465 = vmatprep.subr.mxu0 0.0
        %1466 = vmatpush1.xpose.msra.mxu0 0.0
        %1467 = vmatprep.mubr.f32.mxu0 0.0
        %1468 = vmatmul.mubr.f32.gmra.mrb[0].mxu0 %v1398
        %v1469 = vpop.f32.mrb[0].mxu0
        %v1470 = vadd.f32 0.0, %v1469
        %v1471 = vpop.f32.mrb[0].mxu0
        %1472 = vdwg.mxu0
        %v1473 = vmul.f32 %v1242, 0.35355338
        %v1474 = vmul.f32 %v1318, 0.35355338
        %v1475 = vmul.f32 %v1394, 0.35355338
        %v1476 = vmul.f32 %v1470, 0.35355338
        %v1477 = vsel %vm1168, %v1473, -inf
        %1478 = vmax.xlane.f32.xlu0 %v1477
        %v1479 = vpop.xlane.xlu0 %1478
        %v1480 = vsel %vm1168, %v1474, -inf
        %1481 = vmax.xlane.f32.xlu0 %v1480
        %v1482 = vpop.xlane.xlu0 %1481
        %v1483 = vsel %vm1168, %v1475, -inf
        %1484 = vmax.xlane.f32.xlu0 %v1483
        %v1485 = vpop.xlane.xlu0 %1484
        %v1486 = vsel %vm1168, %v1476, -inf
        %1487 = vmax.xlane.f32.xlu0 %v1486
        %v1488 = vpop.xlane.xlu0 %1487
        %v1489 = vsub.f32 %v1473, %v1479
        %v1490 = vsub.f32 %v1474, %v1482
        %v1491 = vsub.f32 %v1475, %v1485
        %v1492 = vsub.f32 %v1476, %v1488
        %v1493 = vmul.f32 %v1489, 1.442695
        %v1494 = vpow.pop %v1493
        %v1495 = vmul.f32 %v1490, 1.442695
        %v1496 = vpow.pop %v1495
        %v1497 = vmul.f32 %v1491, 1.442695
        %v1498 = vpow.pop %v1497
        %v1499 = vmul.f32 %v1492, 1.442695
        %v1500 = vpow.pop %v1499
        %v1501 = vsel %vm1168, %v1494, 0.0
        %1502 = vadd.xlane.f32.xlu0 %v1501
        %v1503 = vpop.xlane.xlu0 %1502
        %v1504 = vsel %vm1168, %v1496, 0.0
        %1505 = vadd.xlane.f32.xlu0 %v1504
        %v1506 = vpop.xlane.xlu0 %1505
        %v1507 = vsel %vm1168, %v1498, 0.0
        %1508 = vadd.xlane.f32.xlu0 %v1507
        %v1509 = vpop.xlane.xlu0 %1508
        %v1510 = vsel %vm1168, %v1500, 0.0
        %1511 = vadd.xlane.f32.xlu0 %v1510
        %v1512 = vpop.xlane.xlu0 %1511
        %v1513 = vrcp.pop %v1503
        %v1514 = vrcp.pop %v1506
        %v1515 = vrcp.pop %v1509
        %v1516 = vrcp.pop %v1512
        %v1517 = vmul.f32 %v1494, %v1513
        %v1518 = vmul.f32 %v1496, %v1514
        %v1519 = vmul.f32 %v1498, %v1515
        %v1520 = vmul.f32 %v1500, %v1516
        %v1522 = vsel %vm1168, %v1517, 0
        %1524 = vmatprep.subr.mxu0 0.0
        %1525 = vmatpush1.msra.mxu0 %v955
        %1526 = vmatprep.subr.mxu0 0.0
        %1527 = vmatpush1.msra.mxu0 0.0
        %1528 = vmatprep.subr.mxu0 0.0
        %1529 = vmatpush1.msra.mxu0 0.0
        %1530 = vmatprep.subr.mxu0 0.0
        %1531 = vmatpush1.msra.mxu0 0.0
        %1532 = vmatprep.subr.mxu0 0.0
        %1533 = vmatpush1.msra.mxu0 0.0
        %1534 = vmatprep.subr.mxu0 0.0
        %1535 = vmatpush1.msra.mxu0 0.0
        %1536 = vmatprep.subr.mxu0 0.0
        %1537 = vmatpush1.msra.mxu0 0.0
        %1538 = vmatprep.subr.mxu0 0.0
        %1539 = vmatpush1.msra.mxu0 0.0
        %1540 = vmatprep.subr.mxu0 0.0
        %1541 = vmatpush1.msra.mxu0 0.0
        %1542 = vmatprep.subr.mxu0 0.0
        %1543 = vmatpush1.msra.mxu0 0.0
        %1544 = vmatprep.subr.mxu0 0.0
        %1545 = vmatpush1.msra.mxu0 0.0
        %1546 = vmatprep.subr.mxu0 0.0
        %1547 = vmatpush1.msra.mxu0 0.0
        %1548 = vmatprep.subr.mxu0 0.0
        %1549 = vmatpush1.msra.mxu0 0.0
        %1550 = vmatprep.subr.mxu0 0.0
        %1551 = vmatpush1.msra.mxu0 0.0
        %1552 = vmatprep.subr.mxu0 0.0
        %1553 = vmatpush1.msra.mxu0 0.0
        %1554 = vmatprep.subr.mxu0 0.0
        %1555 = vmatpush1.msra.mxu0 0.0
        %1556 = vmatprep.subr.mxu0 0.0
        %1557 = vmatpush1.msra.mxu0 0.0
        %1558 = vmatprep.subr.mxu0 0.0
        %1559 = vmatpush1.msra.mxu0 0.0
        %1560 = vmatprep.subr.mxu0 0.0
        %1561 = vmatpush1.msra.mxu0 0.0
        %1562 = vmatprep.subr.mxu0 0.0
        %1563 = vmatpush1.msra.mxu0 0.0
        %1564 = vmatprep.subr.mxu0 0.0
        %1565 = vmatpush1.msra.mxu0 0.0
        %1566 = vmatprep.subr.mxu0 0.0
        %1567 = vmatpush1.msra.mxu0 0.0
        %1568 = vmatprep.subr.mxu0 0.0
        %1569 = vmatpush1.msra.mxu0 0.0
        %1570 = vmatprep.subr.mxu0 0.0
        %1571 = vmatpush1.msra.mxu0 0.0
        %1572 = vmatprep.subr.mxu0 0.0
        %1573 = vmatpush1.msra.mxu0 0.0
        %1574 = vmatprep.subr.mxu0 0.0
        %1575 = vmatpush1.msra.mxu0 0.0
        %1576 = vmatprep.subr.mxu0 0.0
        %1577 = vmatpush1.msra.mxu0 0.0
        %1578 = vmatprep.subr.mxu0 0.0
        %1579 = vmatpush1.msra.mxu0 0.0
        %1580 = vmatprep.subr.mxu0 0.0
        %1581 = vmatpush1.msra.mxu0 0.0
        %1582 = vmatprep.subr.mxu0 0.0
        %1583 = vmatpush1.msra.mxu0 0.0
        %1584 = vmatprep.subr.mxu0 0.0
        %1585 = vmatpush1.msra.mxu0 0.0
        %1586 = vmatprep.subr.mxu0 0.0
        %1587 = vmatpush1.msra.mxu0 0.0
        %1588 = vmatprep.mubr.f32.mxu0 0.0
        %1589 = vmatmul.mubr.f32.gmra.mrb[0].mxu0 %v1522
        %v1590 = vpop.f32.mrb[0].mxu0
        %v1591 = vadd.f32 0.0, %v1590
        %v1592 = vpop.f32.mrb[0].mxu0
        %1593 = vdwg.mxu0
        %v1595 = vsel %vm1168, %v1518, 0
        %1597 = vmatprep.subr.mxu0 0.0
        %1598 = vmatpush1.msra.mxu0 %v1025
        %1599 = vmatprep.subr.mxu0 0.0
        %1600 = vmatpush1.msra.mxu0 0.0
        %1601 = vmatprep.subr.mxu0 0.0
        %1602 = vmatpush1.msra.mxu0 0.0
        %1603 = vmatprep.subr.mxu0 0.0
        %1604 = vmatpush1.msra.mxu0 0.0
        %1605 = vmatprep.subr.mxu0 0.0
        %1606 = vmatpush1.msra.mxu0 0.0
        %1607 = vmatprep.subr.mxu0 0.0
        %1608 = vmatpush1.msra.mxu0 0.0
        %1609 = vmatprep.subr.mxu0 0.0
        %1610 = vmatpush1.msra.mxu0 0.0
        %1611 = vmatprep.subr.mxu0 0.0
        %1612 = vmatpush1.msra.mxu0 0.0
        %1613 = vmatprep.subr.mxu0 0.0
        %1614 = vmatpush1.msra.mxu0 0.0
        %1615 = vmatprep.subr.mxu0 0.0
        %1616 = vmatpush1.msra.mxu0 0.0
        %1617 = vmatprep.subr.mxu0 0.0
        %1618 = vmatpush1.msra.mxu0 0.0
        %1619 = vmatprep.subr.mxu0 0.0
        %1620 = vmatpush1.msra.mxu0 0.0
        %1621 = vmatprep.subr.mxu0 0.0
        %1622 = vmatpush1.msra.mxu0 0.0
        %1623 = vmatprep.subr.mxu0 0.0
        %1624 = vmatpush1.msra.mxu0 0.0
        %1625 = vmatprep.subr.mxu0 0.0
        %1626 = vmatpush1.msra.mxu0 0.0
        %1627 = vmatprep.subr.mxu0 0.0
        %1628 = vmatpush1.msra.mxu0 0.0
        %1629 = vmatprep.subr.mxu0 0.0
        %1630 = vmatpush1.msra.mxu0 0.0
        %1631 = vmatprep.subr.mxu0 0.0
        %1632 = vmatpush1.msra.mxu0 0.0
        %1633 = vmatprep.subr.mxu0 0.0
        %1634 = vmatpush1.msra.mxu0 0.0
        %1635 = vmatprep.subr.mxu0 0.0
        %1636 = vmatpush1.msra.mxu0 0.0
        %1637 = vmatprep.subr.mxu0 0.0
        %1638 = vmatpush1.msra.mxu0 0.0
        %1639 = vmatprep.subr.mxu0 0.0
        %1640 = vmatpush1.msra.mxu0 0.0
        %1641 = vmatprep.subr.mxu0 0.0
        %1642 = vmatpush1.msra.mxu0 0.0
        %1643 = vmatprep.subr.mxu0 0.0
        %1644 = vmatpush1.msra.mxu0 0.0
        %1645 = vmatprep.subr.mxu0 0.0
        %1646 = vmatpush1.msra.mxu0 0.0
        %1647 = vmatprep.subr.mxu0 0.0
        %1648 = vmatpush1.msra.mxu0 0.0
        %1649 = vmatprep.subr.mxu0 0.0
        %1650 = vmatpush1.msra.mxu0 0.0
        %1651 = vmatprep.subr.mxu0 0.0
        %1652 = vmatpush1.msra.mxu0 0.0
        %1653 = vmatprep.subr.mxu0 0.0
        %1654 = vmatpush1.msra.mxu0 0.0
        %1655 = vmatprep.subr.mxu0 0.0
        %1656 = vmatpush1.msra.mxu0 0.0
        %1657 = vmatprep.subr.mxu0 0.0
        %1658 = vmatpush1.msra.mxu0 0.0
        %1659 = vmatprep.subr.mxu0 0.0
        %1660 = vmatpush1.msra.mxu0 0.0
        %1661 = vmatprep.mubr.f32.mxu0 0.0
        %1662 = vmatmul.mubr.f32.gmra.mrb[0].mxu0 %v1595
        %v1663 = vpop.f32.mrb[0].mxu0
        %v1664 = vadd.f32 0.0, %v1663
        %v1665 = vpop.f32.mrb[0].mxu0
        %1666 = vdwg.mxu0
        %v1668 = vsel %vm1168, %v1519, 0
        %1670 = vmatprep.subr.mxu0 0.0
        %1671 = vmatpush1.msra.mxu0 %v1095
        %1672 = vmatprep.subr.mxu0 0.0
        %1673 = vmatpush1.msra.mxu0 0.0
        %1674 = vmatprep.subr.mxu0 0.0
        %1675 = vmatpush1.msra.mxu0 0.0
        %1676 = vmatprep.subr.mxu0 0.0
        %1677 = vmatpush1.msra.mxu0 0.0
        %1678 = vmatprep.subr.mxu0 0.0
        %1679 = vmatpush1.msra.mxu0 0.0
        %1680 = vmatprep.subr.mxu0 0.0
        %1681 = vmatpush1.msra.mxu0 0.0
        %1682 = vmatprep.subr.mxu0 0.0
        %1683 = vmatpush1.msra.mxu0 0.0
        %1684 = vmatprep.subr.mxu0 0.0
        %1685 = vmatpush1.msra.mxu0 0.0
        %1686 = vmatprep.subr.mxu0 0.0
        %1687 = vmatpush1.msra.mxu0 0.0
        %1688 = vmatprep.subr.mxu0 0.0
        %1689 = vmatpush1.msra.mxu0 0.0
        %1690 = vmatprep.subr.mxu0 0.0
        %1691 = vmatpush1.msra.mxu0 0.0
        %1692 = vmatprep.subr.mxu0 0.0
        %1693 = vmatpush1.msra.mxu0 0.0
        %1694 = vmatprep.subr.mxu0 0.0
        %1695 = vmatpush1.msra.mxu0 0.0
        %1696 = vmatprep.subr.mxu0 0.0
        %1697 = vmatpush1.msra.mxu0 0.0
        %1698 = vmatprep.subr.mxu0 0.0
        %1699 = vmatpush1.msra.mxu0 0.0
        %1700 = vmatprep.subr.mxu0 0.0
        %1701 = vmatpush1.msra.mxu0 0.0
        %1702 = vmatprep.subr.mxu0 0.0
        %1703 = vmatpush1.msra.mxu0 0.0
        %1704 = vmatprep.subr.mxu0 0.0
        %1705 = vmatpush1.msra.mxu0 0.0
        %1706 = vmatprep.subr.mxu0 0.0
        %1707 = vmatpush1.msra.mxu0 0.0
        %1708 = vmatprep.subr.mxu0 0.0
        %1709 = vmatpush1.msra.mxu0 0.0
        %1710 = vmatprep.subr.mxu0 0.0
        %1711 = vmatpush1.msra.mxu0 0.0
        %1712 = vmatprep.subr.mxu0 0.0
        %1713 = vmatpush1.msra.mxu0 0.0
        %1714 = vmatprep.subr.mxu0 0.0
        %1715 = vmatpush1.msra.mxu0 0.0
        %1716 = vmatprep.subr.mxu0 0.0
        %1717 = vmatpush1.msra.mxu0 0.0
        %1718 = vmatprep.subr.mxu0 0.0
        %1719 = vmatpush1.msra.mxu0 0.0
        %1720 = vmatprep.subr.mxu0 0.0
        %1721 = vmatpush1.msra.mxu0 0.0
        %1722 = vmatprep.subr.mxu0 0.0
        %1723 = vmatpush1.msra.mxu0 0.0
        %1724 = vmatprep.subr.mxu0 0.0
        %1725 = vmatpush1.msra.mxu0 0.0
        %1726 = vmatprep.subr.mxu0 0.0
        %1727 = vmatpush1.msra.mxu0 0.0
        %1728 = vmatprep.subr.mxu0 0.0
        %1729 = vmatpush1.msra.mxu0 0.0
        %1730 = vmatprep.subr.mxu0 0.0
        %1731 = vmatpush1.msra.mxu0 0.0
        %1732 = vmatprep.subr.mxu0 0.0
        %1733 = vmatpush1.msra.mxu0 0.0
        %1734 = vmatprep.mubr.f32.mxu0 0.0
        %1735 = vmatmul.mubr.f32.gmra.mrb[0].mxu0 %v1668
        %v1736 = vpop.f32.mrb[0].mxu0
        %v1737 = vadd.f32 0.0, %v1736
        %v1738 = vpop.f32.mrb[0].mxu0
        %1739 = vdwg.mxu0
        %v1741 = vsel %vm1168, %v1520, 0
        %1743 = vmatprep.subr.mxu0 0.0
        %1744 = vmatpush1.msra.mxu0 %v1165
        %1745 = vmatprep.subr.mxu0 0.0
        %1746 = vmatpush1.msra.mxu0 0.0
        %1747 = vmatprep.subr.mxu0 0.0
        %1748 = vmatpush1.msra.mxu0 0.0
        %1749 = vmatprep.subr.mxu0 0.0
        %1750 = vmatpush1.msra.mxu0 0.0
        %1751 = vmatprep.subr.mxu0 0.0
        %1752 = vmatpush1.msra.mxu0 0.0
        %1753 = vmatprep.subr.mxu0 0.0
        %1754 = vmatpush1.msra.mxu0 0.0
        %1755 = vmatprep.subr.mxu0 0.0
        %1756 = vmatpush1.msra.mxu0 0.0
        %1757 = vmatprep.subr.mxu0 0.0
        %1758 = vmatpush1.msra.mxu0 0.0
        %1759 = vmatprep.subr.mxu0 0.0
        %1760 = vmatpush1.msra.mxu0 0.0
        %1761 = vmatprep.subr.mxu0 0.0
        %1762 = vmatpush1.msra.mxu0 0.0
        %1763 = vmatprep.subr.mxu0 0.0
        %1764 = vmatpush1.msra.mxu0 0.0
        %1765 = vmatprep.subr.mxu0 0.0
        %1766 = vmatpush1.msra.mxu0 0.0
        %1767 = vmatprep.subr.mxu0 0.0
        %1768 = vmatpush1.msra.mxu0 0.0
        %1769 = vmatprep.subr.mxu0 0.0
        %1770 = vmatpush1.msra.mxu0 0.0
        %1771 = vmatprep.subr.mxu0 0.0
        %1772 = vmatpush1.msra.mxu0 0.0
        %1773 = vmatprep.subr.mxu0 0.0
        %1774 = vmatpush1.msra.mxu0 0.0
        %1775 = vmatprep.subr.mxu0 0.0
        %1776 = vmatpush1.msra.mxu0 0.0
        %1777 = vmatprep.subr.mxu0 0.0
        %1778 = vmatpush1.msra.mxu0 0.0
        %1779 = vmatprep.subr.mxu0 0.0
        %1780 = vmatpush1.msra.mxu0 0.0
        %1781 = vmatprep.subr.mxu0 0.0
        %1782 = vmatpush1.msra.mxu0 0.0
        %1783 = vmatprep.subr.mxu0 0.0
        %1784 = vmatpush1.msra.mxu0 0.0
        %1785 = vmatprep.subr.mxu0 0.0
        %1786 = vmatpush1.msra.mxu0 0.0
        %1787 = vmatprep.subr.mxu0 0.0
        %1788 = vmatpush1.msra.mxu0 0.0
        %1789 = vmatprep.subr.mxu0 0.0
        %1790 = vmatpush1.msra.mxu0 0.0
        %1791 = vmatprep.subr.mxu0 0.0
        %1792 = vmatpush1.msra.mxu0 0.0
        %1793 = vmatprep.subr.mxu0 0.0
        %1794 = vmatpush1.msra.mxu0 0.0
        %1795 = vmatprep.subr.mxu0 0.0
        %1796 = vmatpush1.msra.mxu0 0.0
        %1797 = vmatprep.subr.mxu0 0.0
        %1798 = vmatpush1.msra.mxu0 0.0
        %1799 = vmatprep.subr.mxu0 0.0
        %1800 = vmatpush1.msra.mxu0 0.0
        %1801 = vmatprep.subr.mxu0 0.0
        %1802 = vmatpush1.msra.mxu0 0.0
        %1803 = vmatprep.subr.mxu0 0.0
        %1804 = vmatpush1.msra.mxu0 0.0
        %1805 = vmatprep.subr.mxu0 0.0
        %1806 = vmatpush1.msra.mxu0 0.0
        %1807 = vmatprep.mubr.f32.mxu0 0.0
        %1808 = vmatmul.mubr.f32.gmra.mrb[0].mxu0 %v1741
        %v1809 = vpop.f32.mrb[0].mxu0
        %v1810 = vadd.f32 0.0, %v1809
        %v1811 = vpop.f32.mrb[0].mxu0
        %1812 = vdwg.mxu0
        %v1813 = vld [vmem:[%s2] sm:$0xff]
        %v1814 = vld [vmem:[%s2 + $0x8] sm:$0xff]
        %v1815 = vld [vmem:[%s2 + $0x10] sm:$0xff]
        %v1816 = vld [vmem:[%s2 + $0x18] sm:$0xff]
        %v1818 = vsel %vm1168, %v1591, 0
        %1820 = vmatprep.subr.mxu0 0.0
        %1821 = vmatpush1.msra.mxu0 %v1813
        %1822 = vmatprep.subr.mxu0 0.0
        %1823 = vmatpush1.msra.mxu0 0.0
        %1824 = vmatprep.subr.mxu0 0.0
        %1825 = vmatpush1.msra.mxu0 0.0
        %1826 = vmatprep.subr.mxu0 0.0
        %1827 = vmatpush1.msra.mxu0 0.0
        %1828 = vmatprep.subr.mxu0 0.0
        %1829 = vmatpush1.msra.mxu0 0.0
        %1830 = vmatprep.subr.mxu0 0.0
        %1831 = vmatpush1.msra.mxu0 0.0
        %1832 = vmatprep.subr.mxu0 0.0
        %1833 = vmatpush1.msra.mxu0 0.0
        %1834 = vmatprep.subr.mxu0 0.0
        %1835 = vmatpush1.msra.mxu0 0.0
        %1836 = vmatprep.subr.mxu0 0.0
        %1837 = vmatpush1.msra.mxu0 0.0
        %1838 = vmatprep.subr.mxu0 0.0
        %1839 = vmatpush1.msra.mxu0 0.0
        %1840 = vmatprep.subr.mxu0 0.0
        %1841 = vmatpush1.msra.mxu0 0.0
        %1842 = vmatprep.subr.mxu0 0.0
        %1843 = vmatpush1.msra.mxu0 0.0
        %1844 = vmatprep.subr.mxu0 0.0
        %1845 = vmatpush1.msra.mxu0 0.0
        %1846 = vmatprep.subr.mxu0 0.0
        %1847 = vmatpush1.msra.mxu0 0.0
        %1848 = vmatprep.subr.mxu0 0.0
        %1849 = vmatpush1.msra.mxu0 0.0
        %1850 = vmatprep.subr.mxu0 0.0
        %1851 = vmatpush1.msra.mxu0 0.0
        %1852 = vmatprep.subr.mxu0 0.0
        %1853 = vmatpush1.msra.mxu0 0.0
        %1854 = vmatprep.subr.mxu0 0.0
        %1855 = vmatpush1.msra.mxu0 0.0
        %1856 = vmatprep.subr.mxu0 0.0
        %1857 = vmatpush1.msra.mxu0 0.0
        %1858 = vmatprep.subr.mxu0 0.0
        %1859 = vmatpush1.msra.mxu0 0.0
        %1860 = vmatprep.subr.mxu0 0.0
        %1861 = vmatpush1.msra.mxu0 0.0
        %1862 = vmatprep.subr.mxu0 0.0
        %1863 = vmatpush1.msra.mxu0 0.0
        %1864 = vmatprep.subr.mxu0 0.0
        %1865 = vmatpush1.msra.mxu0 0.0
        %1866 = vmatprep.subr.mxu0 0.0
        %1867 = vmatpush1.msra.mxu0 0.0
        %1868 = vmatprep.subr.mxu0 0.0
        %1869 = vmatpush1.msra.mxu0 0.0
        %1870 = vmatprep.subr.mxu0 0.0
        %1871 = vmatpush1.msra.mxu0 0.0
        %1872 = vmatprep.subr.mxu0 0.0
        %1873 = vmatpush1.msra.mxu0 0.0
        %1874 = vmatprep.subr.mxu0 0.0
        %1875 = vmatpush1.msra.mxu0 0.0
        %1876 = vmatprep.subr.mxu0 0.0
        %1877 = vmatpush1.msra.mxu0 0.0
        %1878 = vmatprep.subr.mxu0 0.0
        %1879 = vmatpush1.msra.mxu0 0.0
        %1880 = vmatprep.subr.mxu0 0.0
        %1881 = vmatpush1.msra.mxu0 0.0
        %1882 = vmatprep.subr.mxu0 0.0
        %1883 = vmatpush1.msra.mxu0 0.0
        %1884 = vmatprep.mubr.f32.mxu0 0.0
        %1885 = vmatmul.mubr.f32.gmra.mrb[0].mxu0 %v1818
        %v1886 = vpop.f32.mrb[0].mxu0
        %v1887 = vadd.f32 0.0, %v1886
        %v1888 = vpop.f32.mrb[0].mxu0
        %1889 = vdwg.mxu0
        %v1891 = vsel %vm1168, %v1664, 0
        %1893 = vmatprep.subr.mxu0 0.0
        %1894 = vmatpush1.msra.mxu0 %v1814
        %1895 = vmatprep.subr.mxu0 0.0
        %1896 = vmatpush1.msra.mxu0 0.0
        %1897 = vmatprep.subr.mxu0 0.0
        %1898 = vmatpush1.msra.mxu0 0.0
        %1899 = vmatprep.subr.mxu0 0.0
        %1900 = vmatpush1.msra.mxu0 0.0
        %1901 = vmatprep.subr.mxu0 0.0
        %1902 = vmatpush1.msra.mxu0 0.0
        %1903 = vmatprep.subr.mxu0 0.0
        %1904 = vmatpush1.msra.mxu0 0.0
        %1905 = vmatprep.subr.mxu0 0.0
        %1906 = vmatpush1.msra.mxu0 0.0
        %1907 = vmatprep.subr.mxu0 0.0
        %1908 = vmatpush1.msra.mxu0 0.0
        %1909 = vmatprep.subr.mxu0 0.0
        %1910 = vmatpush1.msra.mxu0 0.0
        %1911 = vmatprep.subr.mxu0 0.0
        %1912 = vmatpush1.msra.mxu0 0.0
        %1913 = vmatprep.subr.mxu0 0.0
        %1914 = vmatpush1.msra.mxu0 0.0
        %1915 = vmatprep.subr.mxu0 0.0
        %1916 = vmatpush1.msra.mxu0 0.0
        %1917 = vmatprep.subr.mxu0 0.0
        %1918 = vmatpush1.msra.mxu0 0.0
        %1919 = vmatprep.subr.mxu0 0.0
        %1920 = vmatpush1.msra.mxu0 0.0
        %1921 = vmatprep.subr.mxu0 0.0
        %1922 = vmatpush1.msra.mxu0 0.0
        %1923 = vmatprep.subr.mxu0 0.0
        %1924 = vmatpush1.msra.mxu0 0.0
        %1925 = vmatprep.subr.mxu0 0.0
        %1926 = vmatpush1.msra.mxu0 0.0
        %1927 = vmatprep.subr.mxu0 0.0
        %1928 = vmatpush1.msra.mxu0 0.0
        %1929 = vmatprep.subr.mxu0 0.0
        %1930 = vmatpush1.msra.mxu0 0.0
        %1931 = vmatprep.subr.mxu0 0.0
        %1932 = vmatpush1.msra.mxu0 0.0
        %1933 = vmatprep.subr.mxu0 0.0
        %1934 = vmatpush1.msra.mxu0 0.0
        %1935 = vmatprep.subr.mxu0 0.0
        %1936 = vmatpush1.msra.mxu0 0.0
        %1937 = vmatprep.subr.mxu0 0.0
        %1938 = vmatpush1.msra.mxu0 0.0
        %1939 = vmatprep.subr.mxu0 0.0
        %1940 = vmatpush1.msra.mxu0 0.0
        %1941 = vmatprep.subr.mxu0 0.0
        %1942 = vmatpush1.msra.mxu0 0.0
        %1943 = vmatprep.subr.mxu0 0.0
        %1944 = vmatpush1.msra.mxu0 0.0
        %1945 = vmatprep.subr.mxu0 0.0
        %1946 = vmatpush1.msra.mxu0 0.0
        %1947 = vmatprep.subr.mxu0 0.0
        %1948 = vmatpush1.msra.mxu0 0.0
        %1949 = vmatprep.subr.mxu0 0.0
        %1950 = vmatpush1.msra.mxu0 0.0
        %1951 = vmatprep.subr.mxu0 0.0
        %1952 = vmatpush1.msra.mxu0 0.0
        %1953 = vmatprep.subr.mxu0 0.0
        %1954 = vmatpush1.msra.mxu0 0.0
        %1955 = vmatprep.subr.mxu0 0.0
        %1956 = vmatpush1.msra.mxu0 0.0
        %1957 = vmatprep.mubr.f32.mxu0 0.0
        %1958 = vmatmul.mubr.f32.gmra.mrb[0].mxu0 %v1891
        %v1959 = vpop.f32.mrb[0].mxu0
        %v1960 = vadd.f32 0.0, %v1959
        %v1961 = vpop.f32.mrb[0].mxu0
        %1962 = vdwg.mxu0
        %v1964 = vsel %vm1168, %v1737, 0
        %1966 = vmatprep.subr.mxu0 0.0
        %1967 = vmatpush1.msra.mxu0 %v1815
        %1968 = vmatprep.subr.mxu0 0.0
        %1969 = vmatpush1.msra.mxu0 0.0
        %1970 = vmatprep.subr.mxu0 0.0
        %1971 = vmatpush1.msra.mxu0 0.0
        %1972 = vmatprep.subr.mxu0 0.0
        %1973 = vmatpush1.msra.mxu0 0.0
        %1974 = vmatprep.subr.mxu0 0.0
        %1975 = vmatpush1.msra.mxu0 0.0
        %1976 = vmatprep.subr.mxu0 0.0
        %1977 = vmatpush1.msra.mxu0 0.0
        %1978 = vmatprep.subr.mxu0 0.0
        %1979 = vmatpush1.msra.mxu0 0.0
        %1980 = vmatprep.subr.mxu0 0.0
        %1981 = vmatpush1.msra.mxu0 0.0
        %1982 = vmatprep.subr.mxu0 0.0
        %1983 = vmatpush1.msra.mxu0 0.0
        %1984 = vmatprep.subr.mxu0 0.0
        %1985 = vmatpush1.msra.mxu0 0.0
        %1986 = vmatprep.subr.mxu0 0.0
        %1987 = vmatpush1.msra.mxu0 0.0
        %1988 = vmatprep.subr.mxu0 0.0
        %1989 = vmatpush1.msra.mxu0 0.0
        %1990 = vmatprep.subr.mxu0 0.0
        %1991 = vmatpush1.msra.mxu0 0.0
        %1992 = vmatprep.subr.mxu0 0.0
        %1993 = vmatpush1.msra.mxu0 0.0
        %1994 = vmatprep.subr.mxu0 0.0
        %1995 = vmatpush1.msra.mxu0 0.0
        %1996 = vmatprep.subr.mxu0 0.0
        %1997 = vmatpush1.msra.mxu0 0.0
        %1998 = vmatprep.subr.mxu0 0.0
        %1999 = vmatpush1.msra.mxu0 0.0
        %2000 = vmatprep.subr.mxu0 0.0
        %2001 = vmatpush1.msra.mxu0 0.0
        %2002 = vmatprep.subr.mxu0 0.0
        %2003 = vmatpush1.msra.mxu0 0.0
        %2004 = vmatprep.subr.mxu0 0.0
        %2005 = vmatpush1.msra.mxu0 0.0
        %2006 = vmatprep.subr.mxu0 0.0
        %2007 = vmatpush1.msra.mxu0 0.0
        %2008 = vmatprep.subr.mxu0 0.0
        %2009 = vmatpush1.msra.mxu0 0.0
        %2010 = vmatprep.subr.mxu0 0.0
        %2011 = vmatpush1.msra.mxu0 0.0
        %2012 = vmatprep.subr.mxu0 0.0
        %2013 = vmatpush1.msra.mxu0 0.0
        %2014 = vmatprep.subr.mxu0 0.0
        %2015 = vmatpush1.msra.mxu0 0.0
        %2016 = vmatprep.subr.mxu0 0.0
        %2017 = vmatpush1.msra.mxu0 0.0
        %2018 = vmatprep.subr.mxu0 0.0
        %2019 = vmatpush1.msra.mxu0 0.0
        %2020 = vmatprep.subr.mxu0 0.0
        %2021 = vmatpush1.msra.mxu0 0.0
        %2022 = vmatprep.subr.mxu0 0.0
        %2023 = vmatpush1.msra.mxu0 0.0
        %2024 = vmatprep.subr.mxu0 0.0
        %2025 = vmatpush1.msra.mxu0 0.0
        %2026 = vmatprep.subr.mxu0 0.0
        %2027 = vmatpush1.msra.mxu0 0.0
        %2028 = vmatprep.subr.mxu0 0.0
        %2029 = vmatpush1.msra.mxu0 0.0
        %2030 = vmatprep.mubr.f32.mxu0 0.0
        %2031 = vmatmul.mubr.f32.gmra.mrb[0].mxu0 %v1964
        %v2032 = vpop.f32.mrb[0].mxu0
        %v2033 = vadd.f32 0.0, %v2032
        %v2034 = vpop.f32.mrb[0].mxu0
        %2035 = vdwg.mxu0
        %v2037 = vsel %vm1168, %v1810, 0
        %2039 = vmatprep.subr.mxu0 0.0
        %2040 = vmatpush1.msra.mxu0 %v1816
        %2041 = vmatprep.subr.mxu0 0.0
        %2042 = vmatpush1.msra.mxu0 0.0
        %2043 = vmatprep.subr.mxu0 0.0
        %2044 = vmatpush1.msra.mxu0 0.0
        %2045 = vmatprep.subr.mxu0 0.0
        %2046 = vmatpush1.msra.mxu0 0.0
        %2047 = vmatprep.subr.mxu0 0.0
        %2048 = vmatpush1.msra.mxu0 0.0
        %2049 = vmatprep.subr.mxu0 0.0
        %2050 = vmatpush1.msra.mxu0 0.0
        %2051 = vmatprep.subr.mxu0 0.0
        %2052 = vmatpush1.msra.mxu0 0.0
        %2053 = vmatprep.subr.mxu0 0.0
        %2054 = vmatpush1.msra.mxu0 0.0
        %2055 = vmatprep.subr.mxu0 0.0
        %2056 = vmatpush1.msra.mxu0 0.0
        %2057 = vmatprep.subr.mxu0 0.0
        %2058 = vmatpush1.msra.mxu0 0.0
        %2059 = vmatprep.subr.mxu0 0.0
        %2060 = vmatpush1.msra.mxu0 0.0
        %2061 = vmatprep.subr.mxu0 0.0
        %2062 = vmatpush1.msra.mxu0 0.0
        %2063 = vmatprep.subr.mxu0 0.0
        %2064 = vmatpush1.msra.mxu0 0.0
        %2065 = vmatprep.subr.mxu0 0.0
        %2066 = vmatpush1.msra.mxu0 0.0
        %2067 = vmatprep.subr.mxu0 0.0
        %2068 = vmatpush1.msra.mxu0 0.0
        %2069 = vmatprep.subr.mxu0 0.0
        %2070 = vmatpush1.msra.mxu0 0.0
        %2071 = vmatprep.subr.mxu0 0.0
        %2072 = vmatpush1.msra.mxu0 0.0
        %2073 = vmatprep.subr.mxu0 0.0
        %2074 = vmatpush1.msra.mxu0 0.0
        %2075 = vmatprep.subr.mxu0 0.0
        %2076 = vmatpush1.msra.mxu0 0.0
        %2077 = vmatprep.subr.mxu0 0.0
        %2078 = vmatpush1.msra.mxu0 0.0
        %2079 = vmatprep.subr.mxu0 0.0
        %2080 = vmatpush1.msra.mxu0 0.0
        %2081 = vmatprep.subr.mxu0 0.0
        %2082 = vmatpush1.msra.mxu0 0.0
        %2083 = vmatprep.subr.mxu0 0.0
        %2084 = vmatpush1.msra.mxu0 0.0
        %2085 = vmatprep.subr.mxu0 0.0
        %2086 = vmatpush1.msra.mxu0 0.0
        %2087 = vmatprep.subr.mxu0 0.0
        %2088 = vmatpush1.msra.mxu0 0.0
        %2089 = vmatprep.subr.mxu0 0.0
        %2090 = vmatpush1.msra.mxu0 0.0
        %2091 = vmatprep.subr.mxu0 0.0
        %2092 = vmatpush1.msra.mxu0 0.0
        %2093 = vmatprep.subr.mxu0 0.0
        %2094 = vmatpush1.msra.mxu0 0.0
        %2095 = vmatprep.subr.mxu0 0.0
        %2096 = vmatpush1.msra.mxu0 0.0
        %2097 = vmatprep.subr.mxu0 0.0
        %2098 = vmatpush1.msra.mxu0 0.0
        %2099 = vmatprep.subr.mxu0 0.0
        %2100 = vmatpush1.msra.mxu0 0.0
        %2101 = vmatprep.subr.mxu0 0.0
        %2102 = vmatpush1.msra.mxu0 0.0
        %2103 = vmatprep.mubr.f32.mxu0 0.0
        %2104 = vmatmul.mubr.f32.gmra.mrb[0].mxu0 %v2037
        %v2105 = vpop.f32.mrb[0].mxu0
        %v2106 = vadd.f32 0.0, %v2105
        %v2107 = vpop.f32.mrb[0].mxu0
        %2108 = vdwg.mxu0
        %v2109 = vsel %vm249, %v1887, 0.0
        %v2110 = vsel %vm249, %v1960, 0.0
        %v2111 = vadd.f32 %v2109, %v2110
        %v2112 = vsel %vm249, %v2033, 0.0
        %v2113 = vadd.f32 %v2111, %v2112
        %v2114 = vsel %vm249, %v2106, 0.0
        %v2115 = vadd.f32 %v2113, %v2114
        %v2116 = vlaneseq
        %v2117 = vshrl.u32 %v2116, 7
        %v2118 = vsub.s32 4, %v2117
        %v2119 = vrot.slane %v248, %v2118
        %v2120 = vadd.f32 %v2115, %v2119
        %v2121 = vadd.f32 %v247, %v2120
        %v2122 = vsel %vm249, %v2121, 0.0
        %2123 = vadd.xlane.f32.xlu0 %v2122
        %v2124 = vpop.xlane.xlu0 %2123
        %v2125 = vmul.f32 %v2124, 0.03125
        %v2126 = vmul.f32 %v2121, %v2121
        %v2127 = vsel %vm249, %v2126, 0.0
        %2128 = vadd.xlane.f32.xlu0 %v2127
        %v2129 = vpop.xlane.xlu0 %2128
        %v2130 = vmul.f32 %v2129, 0.03125
        %v2131 = vmul.f32 %v2125, %v2125
        %v2132 = vsub.f32 %v2130, %v2131
        %v2133 = vsub.f32 %v2121, %v2125
        %v2134 = vadd.f32 %v2132, 1e-05
        %v2135 = vrsqrt.pop %v2134
        %v2136 = vmul.f32 %v2133, %v2135
        %v2137 = vlaneseq
        %v2138 = vshrl.u32 %v2137, 7
        %v2139 = vsub.s32 2, %v2138
        %v2140 = vrot.slane %v248, %v2139
        %v2141 = vmul.f32 %v2136, %v2140
        %v2142 = vlaneseq
        %v2143 = vshrl.u32 %v2142, 7
        %v2144 = vsub.s32 3, %v2143
        %v2145 = vrot.slane %v248, %v2144
        %v2146 = vadd.f32 %v2141, %v2145
        %v2147 = vld [vmem:[%s3] sm:$0xff]
        %v2148 = vld [vmem:[%s3 + $0x8] sm:$0xff]
        %v2149 = vld [vmem:[%s3 + $0x10] sm:$0xff]
        %v2150 = vld [vmem:[%s3 + $0x18] sm:$0xff]
        %v2151 = vlaneseq
        %v2152 = vshrl.u32 %v2151, 7
        %v2153 = vsub.s32 6, %v2152
        %v2154 = vrot.slane %v248, %v2153
        %v2156 = vsel %vm249, %v2146, 0
        %2158 = vmatprep.subr.mxu0 0.0
        %2159 = vmatpush1.msra.mxu0 %v2147
        %2160 = vmatprep.subr.mxu0 0.0
        %2161 = vmatpush1.msra.mxu0 %v2148
        %2162 = vmatprep.subr.mxu0 0.0
        %2163 = vmatpush1.msra.mxu0 %v2149
        %2164 = vmatprep.subr.mxu0 0.0
        %2165 = vmatpush1.msra.mxu0 %v2150
        %2166 = vmatprep.subr.mxu0 0.0
        %2167 = vmatpush1.msra.mxu0 0.0
        %2168 = vmatprep.subr.mxu0 0.0
        %2169 = vmatpush1.msra.mxu0 0.0
        %2170 = vmatprep.subr.mxu0 0.0
        %2171 = vmatpush1.msra.mxu0 0.0
        %2172 = vmatprep.subr.mxu0 0.0
        %2173 = vmatpush1.msra.mxu0 0.0
        %2174 = vmatprep.subr.mxu0 0.0
        %2175 = vmatpush1.msra.mxu0 0.0
        %2176 = vmatprep.subr.mxu0 0.0
        %2177 = vmatpush1.msra.mxu0 0.0
        %2178 = vmatprep.subr.mxu0 0.0
        %2179 = vmatpush1.msra.mxu0 0.0
        %2180 = vmatprep.subr.mxu0 0.0
        %2181 = vmatpush1.msra.mxu0 0.0
        %2182 = vmatprep.subr.mxu0 0.0
        %2183 = vmatpush1.msra.mxu0 0.0
        %2184 = vmatprep.subr.mxu0 0.0
        %2185 = vmatpush1.msra.mxu0 0.0
        %2186 = vmatprep.subr.mxu0 0.0
        %2187 = vmatpush1.msra.mxu0 0.0
        %2188 = vmatprep.subr.mxu0 0.0
        %2189 = vmatpush1.msra.mxu0 0.0
        %2190 = vmatprep.subr.mxu0 0.0
        %2191 = vmatpush1.msra.mxu0 0.0
        %2192 = vmatprep.subr.mxu0 0.0
        %2193 = vmatpush1.msra.mxu0 0.0
        %2194 = vmatprep.subr.mxu0 0.0
        %2195 = vmatpush1.msra.mxu0 0.0
        %2196 = vmatprep.subr.mxu0 0.0
        %2197 = vmatpush1.msra.mxu0 0.0
        %2198 = vmatprep.subr.mxu0 0.0
        %2199 = vmatpush1.msra.mxu0 0.0
        %2200 = vmatprep.subr.mxu0 0.0
        %2201 = vmatpush1.msra.mxu0 0.0
        %2202 = vmatprep.subr.mxu0 0.0
        %2203 = vmatpush1.msra.mxu0 0.0
        %2204 = vmatprep.subr.mxu0 0.0
        %2205 = vmatpush1.msra.mxu0 0.0
        %2206 = vmatprep.subr.mxu0 0.0
        %2207 = vmatpush1.msra.mxu0 0.0
        %2208 = vmatprep.subr.mxu0 0.0
        %2209 = vmatpush1.msra.mxu0 0.0
        %2210 = vmatprep.subr.mxu0 0.0
        %2211 = vmatpush1.msra.mxu0 0.0
        %2212 = vmatprep.subr.mxu0 0.0
        %2213 = vmatpush1.msra.mxu0 0.0
        %2214 = vmatprep.subr.mxu0 0.0
        %2215 = vmatpush1.msra.mxu0 0.0
        %2216 = vmatprep.subr.mxu0 0.0
        %2217 = vmatpush1.msra.mxu0 0.0
        %2218 = vmatprep.subr.mxu0 0.0
        %2219 = vmatpush1.msra.mxu0 0.0
        %2220 = vmatprep.subr.mxu0 0.0
        %2221 = vmatpush1.msra.mxu0 0.0
        %2222 = vmatprep.mubr.f32.mxu0 0.0
        %2223 = vmatmul.mubr.f32.gmra.mrb[0].mxu0 %v2156
        %v2224 = vpop.f32.mrb[0].mxu0
        %v2225 = vadd.f32 %v2154, %v2224
        %v2226 = vpop.f32.mrb[0].mxu0
        %2227 = vdwg.mxu0
        %v2228 = vmul.f32 %v2225, 0.5
        %v2229 = vmul.f32 %v2225, %v2225
        %v2230 = vmul.f32 %v2229, %v2225
        %v2231 = vmul.f32 %v2230, 0.044715
        %v2232 = vadd.f32 %v2225, %v2231
        %v2233 = vmul.f32 %v2232, 0.7978846
        %v2234 = vtanh.pop %v2233
        %v2235 = vadd.f32 %v2234, 1.0
        %v2236 = vmul.f32 %v2228, %v2235
        %v2237 = vld [vmem:[%s4] sm:$0xff]
        %v2238 = vld [vmem:[%s4 + $0x8] sm:$0xff]
        %v2239 = vld [vmem:[%s4 + $0x10] sm:$0xff]
        %v2240 = vld [vmem:[%s4 + $0x18] sm:$0xff]
        %v2241 = vld [vmem:[%s4 + $0x20] sm:$0xff]
        %v2242 = vld [vmem:[%s4 + $0x28] sm:$0xff]
        %v2243 = vld [vmem:[%s4 + $0x30] sm:$0xff]
        %v2244 = vld [vmem:[%s4 + $0x38] sm:$0xff]
        %v2245 = vld [vmem:[%s4 + $0x40] sm:$0xff]
        %v2246 = vld [vmem:[%s4 + $0x48] sm:$0xff]
        %v2247 = vld [vmem:[%s4 + $0x50] sm:$0xff]
        %v2248 = vld [vmem:[%s4 + $0x58] sm:$0xff]
        %v2249 = vld [vmem:[%s4 + $0x60] sm:$0xff]
        %v2250 = vld [vmem:[%s4 + $0x68] sm:$0xff]
        %v2251 = vld [vmem:[%s4 + $0x70] sm:$0xff]
        %v2252 = vld [vmem:[%s4 + $0x78] sm:$0xff]
        %v2253 = vlaneseq
        %v2254 = vshrl.u32 %v2253, 7
        %v2255 = vsub.s32 5, %v2254
        %v2256 = vrot.slane %v248, %v2255
        %2257 = vmatprep.subr.mxu0 0.0
        %2258 = vmatpush1.msra.mxu0 %v2237
        %2259 = vmatprep.subr.mxu0 0.0
        %2260 = vmatpush1.msra.mxu0 %v2238
        %2261 = vmatprep.subr.mxu0 0.0
        %2262 = vmatpush1.msra.mxu0 %v2239
        %2263 = vmatprep.subr.mxu0 0.0
        %2264 = vmatpush1.msra.mxu0 %v2240
        %2265 = vmatprep.subr.mxu0 0.0
        %2266 = vmatpush1.msra.mxu0 %v2241
        %2267 = vmatprep.subr.mxu0 0.0
        %2268 = vmatpush1.msra.mxu0 %v2242
        %2269 = vmatprep.subr.mxu0 0.0
        %2270 = vmatpush1.msra.mxu0 %v2243
        %2271 = vmatprep.subr.mxu0 0.0
        %2272 = vmatpush1.msra.mxu0 %v2244
        %2273 = vmatprep.subr.mxu0 0.0
        %2274 = vmatpush1.msra.mxu0 %v2245
        %2275 = vmatprep.subr.mxu0 0.0
        %2276 = vmatpush1.msra.mxu0 %v2246
        %2277 = vmatprep.subr.mxu0 0.0
        %2278 = vmatpush1.msra.mxu0 %v2247
        %2279 = vmatprep.subr.mxu0 0.0
        %2280 = vmatpush1.msra.mxu0 %v2248
        %2281 = vmatprep.subr.mxu0 0.0
        %2282 = vmatpush1.msra.mxu0 %v2249
        %2283 = vmatprep.subr.mxu0 0.0
        %2284 = vmatpush1.msra.mxu0 %v2250
        %2285 = vmatprep.subr.mxu0 0.0
        %2286 = vmatpush1.msra.mxu0 %v2251
        %2287 = vmatprep.subr.mxu0 0.0
        %2288 = vmatpush1.msra.mxu0 %v2252
        %2289 = vmatprep.subr.mxu0 0.0
        %2290 = vmatpush1.msra.mxu0 0.0
        %2291 = vmatprep.subr.mxu0 0.0
        %2292 = vmatpush1.msra.mxu0 0.0
        %2293 = vmatprep.subr.mxu0 0.0
        %2294 = vmatpush1.msra.mxu0 0.0
        %2295 = vmatprep.subr.mxu0 0.0
        %2296 = vmatpush1.msra.mxu0 0.0
        %2297 = vmatprep.subr.mxu0 0.0
        %2298 = vmatpush1.msra.mxu0 0.0
        %2299 = vmatprep.subr.mxu0 0.0
        %2300 = vmatpush1.msra.mxu0 0.0
        %2301 = vmatprep.subr.mxu0 0.0
        %2302 = vmatpush1.msra.mxu0 0.0
        %2303 = vmatprep.subr.mxu0 0.0
        %2304 = vmatpush1.msra.mxu0 0.0
        %2305 = vmatprep.subr.mxu0 0.0
        %2306 = vmatpush1.msra.mxu0 0.0
        %2307 = vmatprep.subr.mxu0 0.0
        %2308 = vmatpush1.msra.mxu0 0.0
        %2309 = vmatprep.subr.mxu0 0.0
        %2310 = vmatpush1.msra.mxu0 0.0
        %2311 = vmatprep.subr.mxu0 0.0
        %2312 = vmatpush1.msra.mxu0 0.0
        %2313 = vmatprep.subr.mxu0 0.0
        %2314 = vmatpush1.msra.mxu0 0.0
        %2315 = vmatprep.subr.mxu0 0.0
        %2316 = vmatpush1.msra.mxu0 0.0
        %2317 = vmatprep.subr.mxu0 0.0
        %2318 = vmatpush1.msra.mxu0 0.0
        %2319 = vmatprep.subr.mxu0 0.0
        %2320 = vmatpush1.msra.mxu0 0.0
        %2321 = vmatprep.mubr.f32.mxu0 0.0
        %2322 = vmatmul.mubr.f32.gmra.mrb[0].mxu0 %v2236
        %v2323 = vpop.f32.mrb[0].mxu0
        %v2324 = vadd.f32 %v2256, %v2323
        %v2325 = vpop.f32.mrb[0].mxu0
        %2326 = vdwg.mxu0
        %v2327 = vadd.f32 %v2121, %v2324
        %2328 = vst.msk [vmem:[%s242] sm:$0xff] %vm249, %v2327
        %s2329 = sand.u32 %s159, 1
        %s2330 = scalar_lea.sflag [#allocation3], %s2329
        %s2331 = sand.u32 %s159, 1
        %s2332 = smul.addr %s2331, 8
        %s2333 = scalar_lea.vmem [#allocation2], %s2332
        // Predicated region
        $region45: #{tpu_custom_call.1} parent=43 // pred_check
          %p2334 = pneg %p169
        $region46: #{tpu_custom_call.1} parent=43 // pred_check_branch
          %2336 = sbr.rel (%p2334) target = $region48
        $region47: #{tpu_custom_call.1} parent=43 // pred_region
          %s2338 = ssub.s32 128, 128
          %2339 = vsyncadd %s2330, %s2338
          %s2340 = smul.addr %s20, 128
          %s2341 = scalar_lea.hbm %s6, %s2340
          %s2343 = sshll.u32 %s2333, 4
          %s2344 = int_to_ptr.vmem [resolvable:$true] %s2343
          %2346 = dma.vmem_to_hbm [thread:$0]  %s2344, 128, %s2341, %s2330
        $region48: #{tpu_custom_call.1} parent=43 // pred_fallthru
          _
      $region44: #{tpu_custom_call.1} parent=5 // pred_fallthru
        _
      %p2347 = scmp.le.s32.totalorder 2, %s15
      // Predicated region
      $region49: #{tpu_custom_call.1} parent=5 // pred_check
        %p2348 = pneg %p2347
      $region50: #{tpu_custom_call.1} parent=5 // pred_check_branch
        %2350 = sbr.rel (%p2348) target = $region52
      $region51: #{tpu_custom_call.1} parent=5 // pred_region
        %s2351 = ssub.s32 %s15, 2
        // Predicated region
        $region53: #{tpu_custom_call.1} parent=51 // pred_check
          %p2352 = pneg %p175
        $region54: #{tpu_custom_call.1} parent=51 // pred_check_branch
          %2354 = sbr.rel (%p2352) target = $region56
        $region55: #{tpu_custom_call.1} parent=51 // pred_region
          %s2355 = sand.u32 %s160, 1
          %s2356 = scalar_lea.sflag [#allocation3], %s2355
          %s2357 = sand.u32 %s160, 1
          %s2358 = smul.addr %s2357, 8
          %s2359 = scalar_lea.vmem [#allocation2], %s2358
          %2360 = dma.done %s2356, 128
        $region56: #{tpu_custom_call.1} parent=51 // pred_fallthru
          _
      $region52: #{tpu_custom_call.1} parent=5 // pred_fallthru
        _
    $region6: #{tpu_custom_call.1} parent=1 // loop_footer
      %s19 = sadd.s32 1, %s15
    $region7: #{tpu_custom_call.1} parent=1 // loop_footer_branch
      %14 = sbr.rel target = $region3
    $region8: #{tpu_custom_call.1} parent=1 // loop_exit
      _
    %2361 = vsyncpa [#allocation3], 1
    %s2362 = scalar_lea.sflag [#allocation3], 1
    %2363 = vsyncpa %s2362, 1

</llo_original>
